<compile_context>
chip_gen: v5e
topology: v5e:2x2
jax: 0.10.0
libtpu: 0.0.40
codegen_flags: <defaults>
</compile_context>

<pallas_src>
import math
from functools import partial

import jax
import jax.numpy as jnp
from jax.experimental import pallas as pl
from jax.experimental.pallas import tpu as pltpu

LN_EPS = 1e-6


def _layernorm(x, gamma, beta, eps=LN_EPS):
    # f32 statistics
    mu = jnp.mean(x, axis=-1, keepdims=True)
    var = jnp.mean((x - mu) ** 2, axis=-1, keepdims=True)
    return (x - mu) * jax.lax.rsqrt(var + eps) * gamma + beta


def encoder_block_kernel(xq_ref, xkv_ref,
                         ln1_g_ref, ln1_b_ref,
                         wq_ref, bq_ref, wk_ref, bk_ref, wv_ref, bv_ref,
                         wo3_ref, bo_ref,
                         ln2_g_ref, ln2_b_ref,
                         w1_ref, b1_ref, w2_ref, b2_ref,
                         out_ref, *, num_heads):
    f32 = jnp.float32
    bf16 = jnp.bfloat16

    xq = xq_ref[0]            # (TQ, D) f32 : query rows this grid step produces
    xkv = xkv_ref[0]          # (S,  D) f32 : full sequence, feeds K/V
    TQ, D = xq.shape
    hd = D // num_heads

    ln1_g = ln1_g_ref[...]
    ln1_b = ln1_b_ref[...]

    # ---- LayerNorm 1 (f32 stats), cast to bf16 only for the MXU ----
    xq_n = _layernorm(xq, ln1_g, ln1_b).astype(bf16)
    xkv_n = _layernorm(xkv, ln1_g, ln1_b).astype(bf16)

    # ---- projections: full-width bf16 matmuls, f32 accumulation ----
    # 1/sqrt(hd) is already folded into wq/bq (host side).
    q = jnp.dot(xq_n, wq_ref[...], preferred_element_type=f32) + bq_ref[...]
    k = jnp.dot(xkv_n, wk_ref[...], preferred_element_type=f32) + bk_ref[...]
    v = jnp.dot(xkv_n, wv_ref[...], preferred_element_type=f32) + bv_ref[...]

    # ---- head-major (H, seq, hd) stacks -> one batched dot per attention matmul ----
    q3 = jnp.stack([q[:, h * hd:(h + 1) * hd] for h in range(num_heads)],
                   axis=0).astype(bf16)                      # (H, TQ, hd)
    k3 = jnp.stack([k[:, h * hd:(h + 1) * hd] for h in range(num_heads)],
                   axis=0).astype(bf16)                      # (H, S,  hd)
    v3 = jnp.stack([v[:, h * hd:(h + 1) * hd] for h in range(num_heads)],
                   axis=0).astype(bf16)                      # (H, S,  hd)

    s = jnp.einsum('hqd,hkd->hqk', q3, k3, preferred_element_type=f32)
    s = s - jnp.max(s, axis=-1, keepdims=True)               # stable softmax (f32)
    p = jnp.exp(s)
    p = p * pl.reciprocal(jnp.sum(p, axis=-1, keepdims=True), approx=True)

    o3 = jnp.einsum('hqk,hkd->hqd', p.astype(bf16), v3,
                    preferred_element_type=f32)              # (H, TQ, hd)

    # ---- output projection, head-batched + cross-head sum (no lane concat) ----
    attn = jnp.einsum('hqd,hde->hqe', o3.astype(bf16), wo3_ref[...],
                      preferred_element_type=f32)            # (H, TQ, D)
    attn = jnp.sum(attn, axis=0) + bo_ref[...]               # (TQ, D) f32

    # dropout == identity (inference); residual 1 in f32
    x1 = attn + xq

    # ---- LayerNorm 2 + MLP ----
    yn = _layernorm(x1, ln2_g_ref[...], ln2_b_ref[...]).astype(bf16)
    h1 = jnp.dot(yn, w1_ref[...], preferred_element_type=f32) + b1_ref[...]
    # exact (erf-based) GELU in f32, matching nn.GELU() default numerics
    h1 = 0.5 * h1 * (1.0 + jax.lax.erf(h1 * (1.0 / math.sqrt(2.0))))
    h2 = jnp.dot(h1.astype(bf16), w2_ref[...], preferred_element_type=f32) + b2_ref[...]

    # residual 2
    out_ref[0] = (x1 + h2).astype(out_ref.dtype)


def encoder_block(x, kparams, *, num_heads, q_block=None,
                  vmem_limit_bytes=48 * 1024 * 1024):
    """x: (B, S, D) float32; kparams: dict from prepare_params()."""
    B, S, D = x.shape
    assert D % num_heads == 0, "hidden_dim must be divisible by num_heads"
    if q_block is None:
        q_block = 128 if S % 128 == 0 else S
    assert S % q_block == 0 and (q_block % 8 == 0 or q_block == S)
    nq = S // q_block

    order = ["ln1_g", "ln1_b", "wq", "bq", "wk", "bk", "wv", "bv",
             "wo3", "bo", "ln2_g", "ln2_b", "w1", "b1", "w2", "b2"]
    param_list = [kparams[k] for k in order]

    def const_spec(p):
        zeros = (0,) * p.ndim   # constant block index -> weight stays resident
        return pl.BlockSpec(p.shape, lambda b, qi, _z=zeros: _z)

    in_specs = [
        pl.BlockSpec((1, q_block, D), lambda b, qi: (b, qi, 0)),  # query rows
        pl.BlockSpec((1, S, D), lambda b, qi: (b, 0, 0)),         # full seq for K/V
    ] + [const_spec(p) for p in param_list]

    return pl.pallas_call(
        partial(encoder_block_kernel, num_heads=num_heads),
        out_shape=jax.ShapeDtypeStruct((B, S, D), x.dtype),
        grid=(B, nq),
        in_specs=in_specs,
        out_specs=pl.BlockSpec((1, q_block, D), lambda b, qi: (b, qi, 0)),
        compiler_params=pltpu.CompilerParams(
            dimension_semantics=("parallel", "parallel"),
            vmem_limit_bytes=vmem_limit_bytes),
    )(x, x, *param_list)


# --------------------------- parameters ----------------------------------- #

def init_params(key, hidden_dim, mlp_dim):
    """PyTorch-layout master parameters (f32), mimicking module __init__."""
    D, M = hidden_dim, mlp_dim
    ks = jax.random.split(key, 6)

    def xavier(k, shape):      # (out, in) like torch, gain=1
        fan_out, fan_in = shape
        a = math.sqrt(6.0 / (fan_in + fan_out))
        return jax.random.uniform(k, shape, jnp.float32, -a, a)

    return {
        "ln1_g": jnp.ones((D,), jnp.float32),
        "ln1_b": jnp.zeros((D,), jnp.float32),
        "in_proj_w": xavier(ks[0], (3 * D, D)),        # MHA in_proj_weight
        "in_proj_b": jnp.zeros((3 * D,), jnp.float32),
        "out_proj_w": xavier(ks[1], (D, D)),           # MHA out_proj.weight
        "out_proj_b": jnp.zeros((D,), jnp.float32),
        "ln2_g": jnp.ones((D,), jnp.float32),
        "ln2_b": jnp.zeros((D,), jnp.float32),
        "lin1_w": xavier(ks[2], (M, D)),
        "lin1_b": 1e-6 * jax.random.normal(ks[3], (M,), jnp.float32),
        "lin2_w": xavier(ks[4], (D, M)),
        "lin2_b": 1e-6 * jax.random.normal(ks[5], (D,), jnp.float32),
    }


def prepare_params(p, *, num_heads, compute_dtype=jnp.bfloat16):
    """Kernel layout: weights (in, out) in bf16, biases/LN (1, N) f32,
    softmax scale folded into Q, out-proj stored head-major (H, hd, D)."""
    D = p["ln1_g"].shape[0]
    M = p["lin1_b"].shape[0]
    assert D % num_heads == 0
    hd = D // num_heads
    scale = 1.0 / math.sqrt(hd)
    in_w, in_b = p["in_proj_w"], p["in_proj_b"]
    return {
        "ln1_g": p["ln1_g"].reshape(1, D),
        "ln1_b": p["ln1_b"].reshape(1, D),
        "wq": (in_w[:D].T * scale).astype(compute_dtype),          # (D, D)
        "bq": (in_b[:D] * scale).reshape(1, D).astype(jnp.float32),
        "wk": in_w[D:2 * D].T.astype(compute_dtype),
        "bk": in_b[D:2 * D].reshape(1, D).astype(jnp.float32),
        "wv": in_w[2 * D:].T.astype(compute_dtype),
        "bv": in_b[2 * D:].reshape(1, D).astype(jnp.float32),
        "wo3": p["out_proj_w"].T.reshape(num_heads, hd, D).astype(compute_dtype),
        "bo": p["out_proj_b"].reshape(1, D).astype(jnp.float32),
        "ln2_g": p["ln2_g"].reshape(1, D),
        "ln2_b": p["ln2_b"].reshape(1, D),
        "w1": p["lin1_w"].T.astype(compute_dtype),                 # (D, M)
        "b1": p["lin1_b"].reshape(1, M).astype(jnp.float32),
        "w2": p["lin2_w"].T.astype(compute_dtype),                 # (M, D)
        "b2": p["lin2_b"].reshape(1, D).astype(jnp.float32),
    }


# ------------------------- pure-JAX reference ------------------------------ #

def encoder_block_ref(x, p, *, num_heads):
    B, S, D = x.shape
    hd = D // num_heads
    scale = 1.0 / math.sqrt(hd)

    def ln(v, g, b):
        mu = jnp.mean(v, axis=-1, keepdims=True)
        var = jnp.mean((v - mu) ** 2, axis=-1, keepdims=True)
        return (v - mu) * jax.lax.rsqrt(var + LN_EPS) * g + b

    xn = ln(x, p["ln1_g"], p["ln1_b"])
    qkv = xn @ p["in_proj_w"].T + p["in_proj_b"]
    q, k, v = jnp.split(qkv, 3, axis=-1)
    q = q.reshape(B, S, num_heads, hd).transpose(0, 2, 1, 3)
    k = k.reshape(B, S, num_heads, hd).transpose(0, 2, 1, 3)
    v = v.reshape(B, S, num_heads, hd).transpose(0, 2, 1, 3)
    s = jnp.einsum("bhqd,bhkd->bhqk", q, k) * scale
    a = jax.nn.softmax(s, axis=-1)
    o = jnp.einsum("bhqk,bhkd->bhqd", a, v).transpose(0, 2, 1, 3).reshape(B, S, D)
    attn = o @ p["out_proj_w"].T + p["out_proj_b"]
    x1 = x + attn
    yn = ln(x1, p["ln2_g"], p["ln2_b"])
    h1 = yn @ p["lin1_w"].T + p["lin1_b"]
    h1 = 0.5 * h1 * (1.0 + jax.lax.erf(h1 / math.sqrt(2.0)))
    h2 = h1 @ p["lin2_w"].T + p["lin2_b"]
    return x1 + h2


if __name__ == "__main__":
    B, S, D, M, H = 2, 8, 32, 64, 4       # batch, seq, hidden_dim, mlp_dim, num_heads
    key = jax.random.PRNGKey(0)
    k_x, k_p = jax.random.split(key)
    x = jax.random.normal(k_x, (B, S, D), jnp.float32)

    master = init_params(k_p, D, M)
    kparams = prepare_params(master, num_heads=H)

    out = encoder_block(x, kparams, num_heads=H)
    jax.block_until_ready(out)

    ref = encoder_block_ref(x, master, num_heads=H)
    assert out.shape == (B, S, D) and out.dtype == jnp.float32
    max_err = float(jnp.max(jnp.abs(out - ref)))
    assert jnp.allclose(out, ref, atol=5e-2, rtol=5e-2), f"max abs err {max_err}"
    print("KERNEL_OK")
</pallas_src>

<mosaic_0001>
module attributes {stable_mosaic.version = 11 : i64} {
  func.func @encoder_block_kernel(%arg0: i32, %arg1: i32, %arg2: memref<1x8x32xf32, #tpu.memory_space<vmem>>, %arg3: memref<1x8x32xf32, #tpu.memory_space<vmem>>, %arg4: memref<1x32xf32, #tpu.memory_space<vmem>>, %arg5: memref<1x32xf32, #tpu.memory_space<vmem>>, %arg6: memref<32x32xbf16, #tpu.memory_space<vmem>>, %arg7: memref<1x32xf32, #tpu.memory_space<vmem>>, %arg8: memref<32x32xbf16, #tpu.memory_space<vmem>>, %arg9: memref<1x32xf32, #tpu.memory_space<vmem>>, %arg10: memref<32x32xbf16, #tpu.memory_space<vmem>>, %arg11: memref<1x32xf32, #tpu.memory_space<vmem>>, %arg12: memref<4x8x32xbf16, #tpu.memory_space<vmem>>, %arg13: memref<1x32xf32, #tpu.memory_space<vmem>>, %arg14: memref<1x32xf32, #tpu.memory_space<vmem>>, %arg15: memref<1x32xf32, #tpu.memory_space<vmem>>, %arg16: memref<32x64xbf16, #tpu.memory_space<vmem>>, %arg17: memref<1x64xf32, #tpu.memory_space<vmem>>, %arg18: memref<64x32xbf16, #tpu.memory_space<vmem>>, %arg19: memref<1x32xf32, #tpu.memory_space<vmem>>, %arg20: memref<1x8x32xf32, #tpu.memory_space<vmem>>) attributes {dimension_semantics = [#tpu.dimension_semantics<parallel>, #tpu.dimension_semantics<parallel>], iteration_bounds = array<i64: 2, 1>, scalar_prefetch = 0 : i64, scratch_operands = 0 : i64, tpu.core_type = #tpu.core_type<tc>, window_params = [{transform_indices = @transform_0, window_bounds = array<i64: 1, 8, 32>}, {transform_indices = @transform_1, window_bounds = array<i64: 1, 8, 32>}, {pipeline_mode = #tpu.pipeline_mode<synchronous>, transform_indices = @transform_2, window_bounds = array<i64: 1, 32>}, {pipeline_mode = #tpu.pipeline_mode<synchronous>, transform_indices = @transform_3, window_bounds = array<i64: 1, 32>}, {pipeline_mode = #tpu.pipeline_mode<synchronous>, transform_indices = @transform_4, window_bounds = array<i64: 32, 32>}, {pipeline_mode = #tpu.pipeline_mode<synchronous>, transform_indices = @transform_5, window_bounds = array<i64: 1, 32>}, {pipeline_mode = #tpu.pipeline_mode<synchronous>, transform_indices = @transform_6, window_bounds = array<i64: 32, 32>}, {pipeline_mode = #tpu.pipeline_mode<synchronous>, transform_indices = @transform_7, window_bounds = array<i64: 1, 32>}, {pipeline_mode = #tpu.pipeline_mode<synchronous>, transform_indices = @transform_8, window_bounds = array<i64: 32, 32>}, {pipeline_mode = #tpu.pipeline_mode<synchronous>, transform_indices = @transform_9, window_bounds = array<i64: 1, 32>}, {pipeline_mode = #tpu.pipeline_mode<synchronous>, transform_indices = @transform_10, window_bounds = array<i64: 4, 8, 32>}, {pipeline_mode = #tpu.pipeline_mode<synchronous>, transform_indices = @transform_11, window_bounds = array<i64: 1, 32>}, {pipeline_mode = #tpu.pipeline_mode<synchronous>, transform_indices = @transform_12, window_bounds = array<i64: 1, 32>}, {pipeline_mode = #tpu.pipeline_mode<synchronous>, transform_indices = @transform_13, window_bounds = array<i64: 1, 32>}, {pipeline_mode = #tpu.pipeline_mode<synchronous>, transform_indices = @transform_14, window_bounds = array<i64: 32, 64>}, {pipeline_mode = #tpu.pipeline_mode<synchronous>, transform_indices = @transform_15, window_bounds = array<i64: 1, 64>}, {pipeline_mode = #tpu.pipeline_mode<synchronous>, transform_indices = @transform_16, window_bounds = array<i64: 64, 32>}, {pipeline_mode = #tpu.pipeline_mode<synchronous>, transform_indices = @transform_17, window_bounds = array<i64: 1, 32>}, {transform_indices = @transform_18, window_bounds = array<i64: 1, 8, 32>}]} {
    %c0 = arith.constant 0 : index
    %c0_0 = arith.constant 0 : index
    %c0_1 = arith.constant 0 : index
    %0 = vector.load %arg2[%c0, %c0_0, %c0_1] : memref<1x8x32xf32, #tpu.memory_space<vmem>>, vector<1x8x32xf32>
    %1 = vector.shape_cast %0 : vector<1x8x32xf32> to vector<8x32xf32>
    %c0_2 = arith.constant 0 : index
    %c0_3 = arith.constant 0 : index
    %c0_4 = arith.constant 0 : index
    %2 = vector.load %arg3[%c0_2, %c0_3, %c0_4] : memref<1x8x32xf32, #tpu.memory_space<vmem>>, vector<1x8x32xf32>
    %3 = vector.shape_cast %2 : vector<1x8x32xf32> to vector<8x32xf32>
    %c0_5 = arith.constant 0 : index
    %c0_6 = arith.constant 0 : index
    %4 = vector.load %arg4[%c0_5, %c0_6] : memref<1x32xf32, #tpu.memory_space<vmem>>, vector<1x32xf32>
    %c0_7 = arith.constant 0 : index
    %c0_8 = arith.constant 0 : index
    %5 = vector.load %arg5[%c0_7, %c0_8] : memref<1x32xf32, #tpu.memory_space<vmem>>, vector<1x32xf32>
    %cst = arith.constant dense<0.000000e+00> : vector<8xf32>
    %6 = vector.multi_reduction <add>, %1, %cst [1] : vector<8x32xf32> to vector<8xf32>
    %7 = vector.shape_cast %6 : vector<8xf32> to vector<8x1xf32>
    %cst_9 = arith.constant 3.200000e+01 : f32
    %8 = vector.broadcast %cst_9 : f32 to vector<8x1xf32>
    %9 = arith.divf %7, %8 : vector<8x1xf32>
    %10 = vector.broadcast %9 : vector<8x1xf32> to vector<8x32xf32>
    %11 = arith.subf %1, %10 : vector<8x32xf32>
    %12 = arith.mulf %11, %11 : vector<8x32xf32>
    %cst_10 = arith.constant dense<0.000000e+00> : vector<8xf32>
    %13 = vector.multi_reduction <add>, %12, %cst_10 [1] : vector<8x32xf32> to vector<8xf32>
    %14 = vector.shape_cast %13 : vector<8xf32> to vector<8x1xf32>
    %cst_11 = arith.constant 3.200000e+01 : f32
    %15 = vector.broadcast %cst_11 : f32 to vector<8x1xf32>
    %16 = arith.divf %14, %15 : vector<8x1xf32>
    %17 = vector.broadcast %9 : vector<8x1xf32> to vector<8x32xf32>
    %18 = arith.subf %1, %17 : vector<8x32xf32>
    %cst_12 = arith.constant 9.99999997E-7 : f32
    %19 = vector.broadcast %cst_12 : f32 to vector<8x1xf32>
    %20 = arith.addf %16, %19 : vector<8x1xf32>
    %21 = math.rsqrt %20 : vector<8x1xf32>
    %22 = vector.broadcast %21 : vector<8x1xf32> to vector<8x32xf32>
    %23 = arith.mulf %18, %22 : vector<8x32xf32>
    %24 = vector.broadcast %4 : vector<1x32xf32> to vector<8x32xf32>
    %25 = arith.mulf %23, %24 : vector<8x32xf32>
    %26 = vector.broadcast %5 : vector<1x32xf32> to vector<8x32xf32>
    %27 = arith.addf %25, %26 : vector<8x32xf32>
    %28 = arith.truncf %27 : vector<8x32xf32> to vector<8x32xbf16>
    %cst_13 = arith.constant dense<0.000000e+00> : vector<8xf32>
    %29 = vector.multi_reduction <add>, %3, %cst_13 [1] : vector<8x32xf32> to vector<8xf32>
    %30 = vector.shape_cast %29 : vector<8xf32> to vector<8x1xf32>
    %cst_14 = arith.constant 3.200000e+01 : f32
    %31 = vector.broadcast %cst_14 : f32 to vector<8x1xf32>
    %32 = arith.divf %30, %31 : vector<8x1xf32>
    %33 = vector.broadcast %32 : vector<8x1xf32> to vector<8x32xf32>
    %34 = arith.subf %3, %33 : vector<8x32xf32>
    %35 = arith.mulf %34, %34 : vector<8x32xf32>
    %cst_15 = arith.constant dense<0.000000e+00> : vector<8xf32>
    %36 = vector.multi_reduction <add>, %35, %cst_15 [1] : vector<8x32xf32> to vector<8xf32>
    %37 = vector.shape_cast %36 : vector<8xf32> to vector<8x1xf32>
    %cst_16 = arith.constant 3.200000e+01 : f32
    %38 = vector.broadcast %cst_16 : f32 to vector<8x1xf32>
    %39 = arith.divf %37, %38 : vector<8x1xf32>
    %40 = vector.broadcast %32 : vector<8x1xf32> to vector<8x32xf32>
    %41 = arith.subf %3, %40 : vector<8x32xf32>
    %cst_17 = arith.constant 9.99999997E-7 : f32
    %42 = vector.broadcast %cst_17 : f32 to vector<8x1xf32>
    %43 = arith.addf %39, %42 : vector<8x1xf32>
    %44 = math.rsqrt %43 : vector<8x1xf32>
    %45 = vector.broadcast %44 : vector<8x1xf32> to vector<8x32xf32>
    %46 = arith.mulf %41, %45 : vector<8x32xf32>
    %47 = vector.broadcast %4 : vector<1x32xf32> to vector<8x32xf32>
    %48 = arith.mulf %46, %47 : vector<8x32xf32>
    %49 = vector.broadcast %5 : vector<1x32xf32> to vector<8x32xf32>
    %50 = arith.addf %48, %49 : vector<8x32xf32>
    %51 = arith.truncf %50 : vector<8x32xf32> to vector<8x32xbf16>
    %c0_18 = arith.constant 0 : index
    %c0_19 = arith.constant 0 : index
    %52 = vector.load %arg6[%c0_18, %c0_19] : memref<32x32xbf16, #tpu.memory_space<vmem>>, vector<32x32xbf16>
    %cst_20 = arith.constant dense<0.000000e+00> : vector<8x32xf32>
    %53 = tpu.matmul %28, %52, %cst_20 {dimension_numbers = #tpu.dot_dimension_numbers<[1], [0], [0], [1], [0, 0, 1, 1], [], []>} : vector<8x32xbf16>, vector<32x32xbf16>, vector<8x32xf32> -> vector<8x32xf32>
    %c0_21 = arith.constant 0 : index
    %c0_22 = arith.constant 0 : index
    %54 = vector.load %arg7[%c0_21, %c0_22] : memref<1x32xf32, #tpu.memory_space<vmem>>, vector<1x32xf32>
    %55 = vector.broadcast %54 : vector<1x32xf32> to vector<8x32xf32>
    %56 = arith.addf %53, %55 : vector<8x32xf32>
    %c0_23 = arith.constant 0 : index
    %c0_24 = arith.constant 0 : index
    %57 = vector.load %arg8[%c0_23, %c0_24] : memref<32x32xbf16, #tpu.memory_space<vmem>>, vector<32x32xbf16>
    %cst_25 = arith.constant dense<0.000000e+00> : vector<8x32xf32>
    %58 = tpu.matmul %51, %57, %cst_25 {dimension_numbers = #tpu.dot_dimension_numbers<[1], [0], [0], [1], [0, 0, 1, 1], [], []>} : vector<8x32xbf16>, vector<32x32xbf16>, vector<8x32xf32> -> vector<8x32xf32>
    %c0_26 = arith.constant 0 : index
    %c0_27 = arith.constant 0 : index
    %59 = vector.load %arg9[%c0_26, %c0_27] : memref<1x32xf32, #tpu.memory_space<vmem>>, vector<1x32xf32>
    %60 = vector.broadcast %59 : vector<1x32xf32> to vector<8x32xf32>
    %61 = arith.addf %58, %60 : vector<8x32xf32>
    %c0_28 = arith.constant 0 : index
    %c0_29 = arith.constant 0 : index
    %62 = vector.load %arg10[%c0_28, %c0_29] : memref<32x32xbf16, #tpu.memory_space<vmem>>, vector<32x32xbf16>
    %cst_30 = arith.constant dense<0.000000e+00> : vector<8x32xf32>
    %63 = tpu.matmul %51, %62, %cst_30 {dimension_numbers = #tpu.dot_dimension_numbers<[1], [0], [0], [1], [0, 0, 1, 1], [], []>} : vector<8x32xbf16>, vector<32x32xbf16>, vector<8x32xf32> -> vector<8x32xf32>
    %c0_31 = arith.constant 0 : index
    %c0_32 = arith.constant 0 : index
    %64 = vector.load %arg11[%c0_31, %c0_32] : memref<1x32xf32, #tpu.memory_space<vmem>>, vector<1x32xf32>
    %65 = vector.broadcast %64 : vector<1x32xf32> to vector<8x32xf32>
    %66 = arith.addf %63, %65 : vector<8x32xf32>
    %67 = vector.extract_strided_slice %56 {offsets = [0, 0], sizes = [8, 8], strides = [1, 1]} : vector<8x32xf32> to vector<8x8xf32>
    %68 = vector.extract_strided_slice %56 {offsets = [0, 8], sizes = [8, 8], strides = [1, 1]} : vector<8x32xf32> to vector<8x8xf32>
    %69 = vector.extract_strided_slice %56 {offsets = [0, 16], sizes = [8, 8], strides = [1, 1]} : vector<8x32xf32> to vector<8x8xf32>
    %70 = vector.extract_strided_slice %56 {offsets = [0, 24], sizes = [8, 8], strides = [1, 1]} : vector<8x32xf32> to vector<8x8xf32>
    %71 = vector.shape_cast %67 : vector<8x8xf32> to vector<1x8x8xf32>
    %72 = vector.shape_cast %68 : vector<8x8xf32> to vector<1x8x8xf32>
    %73 = vector.shape_cast %69 : vector<8x8xf32> to vector<1x8x8xf32>
    %74 = vector.shape_cast %70 : vector<8x8xf32> to vector<1x8x8xf32>
    %75 = tpu.concatenate %71, %72, %73, %74 in 0 : vector<1x8x8xf32>, vector<1x8x8xf32>, vector<1x8x8xf32>, vector<1x8x8xf32> -> vector<4x8x8xf32>
    %76 = arith.truncf %75 : vector<4x8x8xf32> to vector<4x8x8xbf16>
    %77 = vector.extract_strided_slice %61 {offsets = [0, 0], sizes = [8, 8], strides = [1, 1]} : vector<8x32xf32> to vector<8x8xf32>
    %78 = vector.extract_strided_slice %61 {offsets = [0, 8], sizes = [8, 8], strides = [1, 1]} : vector<8x32xf32> to vector<8x8xf32>
    %79 = vector.extract_strided_slice %61 {offsets = [0, 16], sizes = [8, 8], strides = [1, 1]} : vector<8x32xf32> to vector<8x8xf32>
    %80 = vector.extract_strided_slice %61 {offsets = [0, 24], sizes = [8, 8], strides = [1, 1]} : vector<8x32xf32> to vector<8x8xf32>
    %81 = vector.shape_cast %77 : vector<8x8xf32> to vector<1x8x8xf32>
    %82 = vector.shape_cast %78 : vector<8x8xf32> to vector<1x8x8xf32>
    %83 = vector.shape_cast %79 : vector<8x8xf32> to vector<1x8x8xf32>
    %84 = vector.shape_cast %80 : vector<8x8xf32> to vector<1x8x8xf32>
    %85 = tpu.concatenate %81, %82, %83, %84 in 0 : vector<1x8x8xf32>, vector<1x8x8xf32>, vector<1x8x8xf32>, vector<1x8x8xf32> -> vector<4x8x8xf32>
    %86 = arith.truncf %85 : vector<4x8x8xf32> to vector<4x8x8xbf16>
    %87 = vector.extract_strided_slice %66 {offsets = [0, 0], sizes = [8, 8], strides = [1, 1]} : vector<8x32xf32> to vector<8x8xf32>
    %88 = vector.extract_strided_slice %66 {offsets = [0, 8], sizes = [8, 8], strides = [1, 1]} : vector<8x32xf32> to vector<8x8xf32>
    %89 = vector.extract_strided_slice %66 {offsets = [0, 16], sizes = [8, 8], strides = [1, 1]} : vector<8x32xf32> to vector<8x8xf32>
    %90 = vector.extract_strided_slice %66 {offsets = [0, 24], sizes = [8, 8], strides = [1, 1]} : vector<8x32xf32> to vector<8x8xf32>
    %91 = vector.shape_cast %87 : vector<8x8xf32> to vector<1x8x8xf32>
    %92 = vector.shape_cast %88 : vector<8x8xf32> to vector<1x8x8xf32>
    %93 = vector.shape_cast %89 : vector<8x8xf32> to vector<1x8x8xf32>
    %94 = vector.shape_cast %90 : vector<8x8xf32> to vector<1x8x8xf32>
    %95 = tpu.concatenate %91, %92, %93, %94 in 0 : vector<1x8x8xf32>, vector<1x8x8xf32>, vector<1x8x8xf32>, vector<1x8x8xf32> -> vector<4x8x8xf32>
    %96 = arith.truncf %95 : vector<4x8x8xf32> to vector<4x8x8xbf16>
    "tpu.trace_start"() <{level = 10 : i32, message = "hqd,hkd->hqk"}> : () -> ()
    %cst_33 = arith.constant dense<0.000000e+00> : vector<4x8x8xf32>
    %97 = tpu.matmul %76, %86, %cst_33 {dimension_numbers = #tpu.dot_dimension_numbers<[2], [2], [1], [1], [0, 0, 0, 1, 1, 1], [0], [0]>} : vector<4x8x8xbf16>, vector<4x8x8xbf16>, vector<4x8x8xf32> -> vector<4x8x8xf32>
    "tpu.trace_stop"() : () -> ()
    %cst_34 = arith.constant dense<0xFF800000> : vector<4x8xf32>
    %98 = vector.multi_reduction <maximumf>, %97, %cst_34 [2] : vector<4x8x8xf32> to vector<4x8xf32>
    %99 = vector.shape_cast %98 : vector<4x8xf32> to vector<4x8x1xf32>
    %100 = vector.broadcast %99 : vector<4x8x1xf32> to vector<4x8x8xf32>
    %101 = arith.subf %97, %100 : vector<4x8x8xf32>
    %102 = math.exp %101 : vector<4x8x8xf32>
    %cst_35 = arith.constant dense<0.000000e+00> : vector<4x8xf32>
    %103 = vector.multi_reduction <add>, %102, %cst_35 [2] : vector<4x8x8xf32> to vector<4x8xf32>
    %104 = vector.shape_cast %103 : vector<4x8xf32> to vector<4x8x1xf32>
    %105 = tpu.reciprocal %104 {approx = true} : vector<4x8x1xf32> -> vector<4x8x1xf32>
    %106 = vector.broadcast %105 : vector<4x8x1xf32> to vector<4x8x8xf32>
    %107 = arith.mulf %102, %106 : vector<4x8x8xf32>
    %108 = arith.truncf %107 : vector<4x8x8xf32> to vector<4x8x8xbf16>
    "tpu.trace_start"() <{level = 10 : i32, message = "hqk,hkd->hqd"}> : () -> ()
    %cst_36 = arith.constant dense<0.000000e+00> : vector<4x8x8xf32>
    %109 = tpu.matmul %108, %96, %cst_36 {dimension_numbers = #tpu.dot_dimension_numbers<[2], [1], [1], [2], [0, 0, 0, 1, 1, 2], [0], [0]>} : vector<4x8x8xbf16>, vector<4x8x8xbf16>, vector<4x8x8xf32> -> vector<4x8x8xf32>
    "tpu.trace_stop"() : () -> ()
    %110 = arith.truncf %109 : vector<4x8x8xf32> to vector<4x8x8xbf16>
    %c0_37 = arith.constant 0 : index
    %c0_38 = arith.constant 0 : index
    %c0_39 = arith.constant 0 : index
    %111 = vector.load %arg12[%c0_37, %c0_38, %c0_39] : memref<4x8x32xbf16, #tpu.memory_space<vmem>>, vector<4x8x32xbf16>
    "tpu.trace_start"() <{level = 10 : i32, message = "hqd,hde->hqe"}> : () -> ()
    %cst_40 = arith.constant dense<0.000000e+00> : vector<4x8x32xf32>
    %112 = tpu.matmul %110, %111, %cst_40 {dimension_numbers = #tpu.dot_dimension_numbers<[2], [1], [1], [2], [0, 0, 0, 1, 1, 2], [0], [0]>} : vector<4x8x8xbf16>, vector<4x8x32xbf16>, vector<4x8x32xf32> -> vector<4x8x32xf32>
    "tpu.trace_stop"() : () -> ()
    %cst_41 = arith.constant dense<0.000000e+00> : vector<8x32xf32>
    %113 = vector.multi_reduction <add>, %112, %cst_41 [0] : vector<4x8x32xf32> to vector<8x32xf32>
    %c0_42 = arith.constant 0 : index
    %c0_43 = arith.constant 0 : index
    %114 = vector.load %arg13[%c0_42, %c0_43] : memref<1x32xf32, #tpu.memory_space<vmem>>, vector<1x32xf32>
    %115 = vector.broadcast %114 : vector<1x32xf32> to vector<8x32xf32>
    %116 = arith.addf %113, %115 : vector<8x32xf32>
    %117 = arith.addf %116, %1 : vector<8x32xf32>
    %c0_44 = arith.constant 0 : index
    %c0_45 = arith.constant 0 : index
    %118 = vector.load %arg14[%c0_44, %c0_45] : memref<1x32xf32, #tpu.memory_space<vmem>>, vector<1x32xf32>
    %c0_46 = arith.constant 0 : index
    %c0_47 = arith.constant 0 : index
    %119 = vector.load %arg15[%c0_46, %c0_47] : memref<1x32xf32, #tpu.memory_space<vmem>>, vector<1x32xf32>
    %cst_48 = arith.constant dense<0.000000e+00> : vector<8xf32>
    %120 = vector.multi_reduction <add>, %117, %cst_48 [1] : vector<8x32xf32> to vector<8xf32>
    %121 = vector.shape_cast %120 : vector<8xf32> to vector<8x1xf32>
    %cst_49 = arith.constant 3.200000e+01 : f32
    %122 = vector.broadcast %cst_49 : f32 to vector<8x1xf32>
    %123 = arith.divf %121, %122 : vector<8x1xf32>
    %124 = vector.broadcast %123 : vector<8x1xf32> to vector<8x32xf32>
    %125 = arith.subf %117, %124 : vector<8x32xf32>
    %126 = arith.mulf %125, %125 : vector<8x32xf32>
    %cst_50 = arith.constant dense<0.000000e+00> : vector<8xf32>
    %127 = vector.multi_reduction <add>, %126, %cst_50 [1] : vector<8x32xf32> to vector<8xf32>
    %128 = vector.shape_cast %127 : vector<8xf32> to vector<8x1xf32>
    %cst_51 = arith.constant 3.200000e+01 : f32
    %129 = vector.broadcast %cst_51 : f32 to vector<8x1xf32>
    %130 = arith.divf %128, %129 : vector<8x1xf32>
    %131 = vector.broadcast %123 : vector<8x1xf32> to vector<8x32xf32>
    %132 = arith.subf %117, %131 : vector<8x32xf32>
    %cst_52 = arith.constant 9.99999997E-7 : f32
    %133 = vector.broadcast %cst_52 : f32 to vector<8x1xf32>
    %134 = arith.addf %130, %133 : vector<8x1xf32>
    %135 = math.rsqrt %134 : vector<8x1xf32>
    %136 = vector.broadcast %135 : vector<8x1xf32> to vector<8x32xf32>
    %137 = arith.mulf %132, %136 : vector<8x32xf32>
    %138 = vector.broadcast %118 : vector<1x32xf32> to vector<8x32xf32>
    %139 = arith.mulf %137, %138 : vector<8x32xf32>
    %140 = vector.broadcast %119 : vector<1x32xf32> to vector<8x32xf32>
    %141 = arith.addf %139, %140 : vector<8x32xf32>
    %142 = arith.truncf %141 : vector<8x32xf32> to vector<8x32xbf16>
    %c0_53 = arith.constant 0 : index
    %c0_54 = arith.constant 0 : index
    %143 = vector.load %arg16[%c0_53, %c0_54] : memref<32x64xbf16, #tpu.memory_space<vmem>>, vector<32x64xbf16>
    %cst_55 = arith.constant dense<0.000000e+00> : vector<8x64xf32>
    %144 = tpu.matmul %142, %143, %cst_55 {dimension_numbers = #tpu.dot_dimension_numbers<[1], [0], [0], [1], [0, 0, 1, 1], [], []>} : vector<8x32xbf16>, vector<32x64xbf16>, vector<8x64xf32> -> vector<8x64xf32>
    %c0_56 = arith.constant 0 : index
    %c0_57 = arith.constant 0 : index
    %145 = vector.load %arg17[%c0_56, %c0_57] : memref<1x64xf32, #tpu.memory_space<vmem>>, vector<1x64xf32>
    %146 = vector.broadcast %145 : vector<1x64xf32> to vector<8x64xf32>
    %147 = arith.addf %144, %146 : vector<8x64xf32>
    %cst_58 = arith.constant 5.000000e-01 : f32
    %148 = vector.broadcast %cst_58 : f32 to vector<8x64xf32>
    %149 = arith.mulf %148, %147 : vector<8x64xf32>
    %cst_59 = arith.constant 0.707106769 : f32
    %150 = vector.broadcast %cst_59 : f32 to vector<8x64xf32>
    %151 = arith.mulf %147, %150 : vector<8x64xf32>
    %152 = math.erf %151 : vector<8x64xf32>
    %cst_60 = arith.constant 1.000000e+00 : f32
    %153 = vector.broadcast %cst_60 : f32 to vector<8x64xf32>
    %154 = arith.addf %153, %152 : vector<8x64xf32>
    %155 = arith.mulf %149, %154 : vector<8x64xf32>
    %156 = arith.truncf %155 : vector<8x64xf32> to vector<8x64xbf16>
    %c0_61 = arith.constant 0 : index
    %c0_62 = arith.constant 0 : index
    %157 = vector.load %arg18[%c0_61, %c0_62] : memref<64x32xbf16, #tpu.memory_space<vmem>>, vector<64x32xbf16>
    %cst_63 = arith.constant dense<0.000000e+00> : vector<8x32xf32>
    %158 = tpu.matmul %156, %157, %cst_63 {dimension_numbers = #tpu.dot_dimension_numbers<[1], [0], [0], [1], [0, 0, 1, 1], [], []>} : vector<8x64xbf16>, vector<64x32xbf16>, vector<8x32xf32> -> vector<8x32xf32>
    %c0_64 = arith.constant 0 : index
    %c0_65 = arith.constant 0 : index
    %159 = vector.load %arg19[%c0_64, %c0_65] : memref<1x32xf32, #tpu.memory_space<vmem>>, vector<1x32xf32>
    %160 = vector.broadcast %159 : vector<1x32xf32> to vector<8x32xf32>
    %161 = arith.addf %158, %160 : vector<8x32xf32>
    %162 = arith.addf %117, %161 : vector<8x32xf32>
    %c0_66 = arith.constant 0 : index
    %c0_67 = arith.constant 0 : index
    %c0_68 = arith.constant 0 : index
    %163 = vector.load %arg20[%c0_66, %c0_67, %c0_68] : memref<1x8x32xf32, #tpu.memory_space<vmem>>, vector<1x8x32xf32>
    %164 = vector.shape_cast %163 : vector<1x8x32xf32> to vector<8x32xf32>
    %165 = vector.shape_cast %162 : vector<8x32xf32> to vector<1x8x32xf32>
    tpu.vector_store %arg20[%c0_66, %c0_67, %c0_68], %165 {strides = array<i32>} : memref<1x8x32xf32, #tpu.memory_space<vmem>>, vector<1x8x32xf32>,
    return
  }
  func.func @transform_0(%arg0: i32, %arg1: i32) -> (i32, i32, i32) {
    %c0_i32 = arith.constant 0 : i32
    %c0_i32_0 = arith.constant 0 : i32
    return %arg0, %arg1, %c0_i32 : i32, i32, i32
  }
  func.func @transform_1(%arg0: i32, %arg1: i32) -> (i32, i32, i32) {
    %c0_i32 = arith.constant 0 : i32
    %c0_i32_0 = arith.constant 0 : i32
    %c0_i32_1 = arith.constant 0 : i32
    return %arg0, %c0_i32, %c0_i32_0 : i32, i32, i32
  }
  func.func @transform_2(%arg0: i32, %arg1: i32) -> (i32, i32) {
    %c0_i32 = arith.constant 0 : i32
    %c0_i32_0 = arith.constant 0 : i32
    %c0_i32_1 = arith.constant 0 : i32
    return %c0_i32, %c0_i32_0 : i32, i32
  }
  func.func @transform_3(%arg0: i32, %arg1: i32) -> (i32, i32) {
    %c0_i32 = arith.constant 0 : i32
    %c0_i32_0 = arith.constant 0 : i32
    %c0_i32_1 = arith.constant 0 : i32
    return %c0_i32, %c0_i32_0 : i32, i32
  }
  func.func @transform_4(%arg0: i32, %arg1: i32) -> (i32, i32) {
    %c0_i32 = arith.constant 0 : i32
    %c0_i32_0 = arith.constant 0 : i32
    %c0_i32_1 = arith.constant 0 : i32
    return %c0_i32, %c0_i32_0 : i32, i32
  }
  func.func @transform_5(%arg0: i32, %arg1: i32) -> (i32, i32) {
    %c0_i32 = arith.constant 0 : i32
    %c0_i32_0 = arith.constant 0 : i32
    %c0_i32_1 = arith.constant 0 : i32
    return %c0_i32, %c0_i32_0 : i32, i32
  }
  func.func @transform_6(%arg0: i32, %arg1: i32) -> (i32, i32) {
    %c0_i32 = arith.constant 0 : i32
    %c0_i32_0 = arith.constant 0 : i32
    %c0_i32_1 = arith.constant 0 : i32
    return %c0_i32, %c0_i32_0 : i32, i32
  }
  func.func @transform_7(%arg0: i32, %arg1: i32) -> (i32, i32) {
    %c0_i32 = arith.constant 0 : i32
    %c0_i32_0 = arith.constant 0 : i32
    %c0_i32_1 = arith.constant 0 : i32
    return %c0_i32, %c0_i32_0 : i32, i32
  }
  func.func @transform_8(%arg0: i32, %arg1: i32) -> (i32, i32) {
    %c0_i32 = arith.constant 0 : i32
    %c0_i32_0 = arith.constant 0 : i32
    %c0_i32_1 = arith.constant 0 : i32
    return %c0_i32, %c0_i32_0 : i32, i32
  }
  func.func @transform_9(%arg0: i32, %arg1: i32) -> (i32, i32) {
    %c0_i32 = arith.constant 0 : i32
    %c0_i32_0 = arith.constant 0 : i32
    %c0_i32_1 = arith.constant 0 : i32
    return %c0_i32, %c0_i32_0 : i32, i32
  }
  func.func @transform_10(%arg0: i32, %arg1: i32) -> (i32, i32, i32) {
    %c0_i32 = arith.constant 0 : i32
    %c0_i32_0 = arith.constant 0 : i32
    %c0_i32_1 = arith.constant 0 : i32
    %c0_i32_2 = arith.constant 0 : i32
    return %c0_i32, %c0_i32_0, %c0_i32_1 : i32, i32, i32
  }
  func.func @transform_11(%arg0: i32, %arg1: i32) -> (i32, i32) {
    %c0_i32 = arith.constant 0 : i32
    %c0_i32_0 = arith.constant 0 : i32
    %c0_i32_1 = arith.constant 0 : i32
    return %c0_i32, %c0_i32_0 : i32, i32
  }
  func.func @transform_12(%arg0: i32, %arg1: i32) -> (i32, i32) {
    %c0_i32 = arith.constant 0 : i32
    %c0_i32_0 = arith.constant 0 : i32
    %c0_i32_1 = arith.constant 0 : i32
    return %c0_i32, %c0_i32_0 : i32, i32
  }
  func.func @transform_13(%arg0: i32, %arg1: i32) -> (i32, i32) {
    %c0_i32 = arith.constant 0 : i32
    %c0_i32_0 = arith.constant 0 : i32
    %c0_i32_1 = arith.constant 0 : i32
    return %c0_i32, %c0_i32_0 : i32, i32
  }
  func.func @transform_14(%arg0: i32, %arg1: i32) -> (i32, i32) {
    %c0_i32 = arith.constant 0 : i32
    %c0_i32_0 = arith.constant 0 : i32
    %c0_i32_1 = arith.constant 0 : i32
    return %c0_i32, %c0_i32_0 : i32, i32
  }
  func.func @transform_15(%arg0: i32, %arg1: i32) -> (i32, i32) {
    %c0_i32 = arith.constant 0 : i32
    %c0_i32_0 = arith.constant 0 : i32
    %c0_i32_1 = arith.constant 0 : i32
    return %c0_i32, %c0_i32_0 : i32, i32
  }
  func.func @transform_16(%arg0: i32, %arg1: i32) -> (i32, i32) {
    %c0_i32 = arith.constant 0 : i32
    %c0_i32_0 = arith.constant 0 : i32
    %c0_i32_1 = arith.constant 0 : i32
    return %c0_i32, %c0_i32_0 : i32, i32
  }
  func.func @transform_17(%arg0: i32, %arg1: i32) -> (i32, i32) {
    %c0_i32 = arith.constant 0 : i32
    %c0_i32_0 = arith.constant 0 : i32
    %c0_i32_1 = arith.constant 0 : i32
    return %c0_i32, %c0_i32_0 : i32, i32
  }
  func.func @transform_18(%arg0: i32, %arg1: i32) -> (i32, i32, i32) {
    %c0_i32 = arith.constant 0 : i32
    %c0_i32_0 = arith.constant 0 : i32
    return %arg0, %arg1, %c0_i32 : i32, i32, i32
  }
}

</mosaic_0001>

<llo_original>
// kernel: tpu_custom_call.1
$region0: #{tpu_custom_call.1}
  #allocation0 [shape = 'u32[]', space=smem, size = 0x4, offset = 0x4, fixed_abs, tag = 'smem constant byte address 0x4 - core index']
  #allocation1 [shape = 'u32[72,128]{1,0:T(1,128)}', space=vmem, size = 0x9000, scoped, tag = 'internal scratch']
  %s0 = inlined_call_operand.vmem [shape: f32[2,8,32], index: 0, kind: input, shape index: {}]
  %s1 = inlined_call_operand.vmem [shape: f32[2,8,32], index: 1, kind: input, shape index: {}]
  %s2 = inlined_call_operand.vmem [shape: f32[1,32], index: 2, kind: input, shape index: {}]
  %s3 = inlined_call_operand.vmem [shape: f32[1,32], index: 3, kind: input, shape index: {}]
  %s4 = inlined_call_operand.vmem [shape: bf16[32,32], index: 4, kind: input, shape index: {}]
  %s5 = inlined_call_operand.vmem [shape: f32[1,32], index: 5, kind: input, shape index: {}]
  %s6 = inlined_call_operand.hbm [shape: bf16[32,32], index: 6, kind: input, shape index: {}]
  %s7 = inlined_call_operand.vmem [shape: f32[1,32], index: 7, kind: input, shape index: {}]
  %s8 = inlined_call_operand.hbm [shape: bf16[32,32], index: 8, kind: input, shape index: {}]
  %s9 = inlined_call_operand.vmem [shape: f32[1,32], index: 9, kind: input, shape index: {}]
  %s10 = inlined_call_operand.hbm [shape: bf16[4,8,32], index: 10, kind: input, shape index: {}]
  %s11 = inlined_call_operand.vmem [shape: f32[1,32], index: 11, kind: input, shape index: {}]
  %s12 = inlined_call_operand.vmem [shape: f32[1,32], index: 12, kind: input, shape index: {}]
  %s13 = inlined_call_operand.vmem [shape: f32[1,32], index: 13, kind: input, shape index: {}]
  %s14 = inlined_call_operand.hbm [shape: bf16[32,64], index: 14, kind: input, shape index: {}]
  %s15 = inlined_call_operand.vmem [shape: f32[1,64], index: 15, kind: input, shape index: {}]
  %s16 = inlined_call_operand.vmem [shape: bf16[64,32], index: 16, kind: input, shape index: {}]
  %s17 = inlined_call_operand.vmem [shape: f32[1,32], index: 17, kind: input, shape index: {}]
  %s18 = inlined_call_operand.hbm [shape: f32[2,8,32], index: 18, kind: output, shape index: {}]
  %s19 = sld [smem:[#allocation0]]
  $region121: #{tpu_custom_call.1} parent=0
    _
  %s21 = ssub.s32 1, %s19
  %s22 = scalar_select 0, %s21, %s19
  $region1: #{tpu_custom_call.1} parent=0
    #allocation2 [shape = 'u8[8192]{0}', space=vmem, size = 0x2000, scoped, tag = 'input window, operand 6, single buffered']
    #allocation3 [shape = 's32[2]{0}', space=sflag, size = 0x8, scoped, tag = 'scoped memory for tpu_custom_call.1']
    #allocation4 [shape = 's32[2]{0}', space=sflag, size = 0x8, scoped, tag = 'scoped memory for tpu_custom_call.1']
    #allocation5 [shape = 'u8[8192]{0}', space=vmem, size = 0x2000, scoped, tag = 'input window, operand 8, single buffered']
    #allocation6 [shape = 's32[1]{0}', space=sflag, size = 0x4, scoped, tag = 'scoped memory for tpu_custom_call.1']
    #allocation7 [shape = 'u8[8192]{0}', space=vmem, size = 0x2000, scoped, tag = 'input window, operand 10, single buffered']
    #allocation8 [shape = 'u8[8192]{0}', space=vmem, size = 0x2000, scoped, tag = 'input window, operand 14, single buffered']
    #allocation9 [shape = 's32[1]{0}', space=sflag, size = 0x4, scoped, tag = 'scoped memory for tpu_custom_call.1']
    #allocation10 [shape = 'u8[8192]{0}', space=vmem, size = 0x2000, scoped, tag = 'output window, operand 0']
    %23 = vsyncpa [#allocation3], 0
    %24 = vsyncpa [#allocation6], 0
    %25 = vsyncpa [#allocation9], 0
    %26 = vsyncpa [#allocation4], 0
    %s27 = scalar_lea.sflag [#allocation4], 1
    %28 = vsyncpa %s27, 0
    loop: start=0, step=1, limit=4
    $region2: #{tpu_custom_call.1} parent=1 // loop_pre_header
      _
    $region3: #{tpu_custom_call.1} parent=1 // loop_header
      %s30 = sphi 0, %s34
      %p31 = scmp.ge.s32.totalorder %s30, 4
      %s37 = sphi 0, %s49
      %s38 = sphi 0, %s45
      %s39 = sphi 0, %s37
      %s40 = sphi 0, %s38
      %s41 = sphi 0, %s39
      %s42 = sphi 0, %s40
      %s54 = sphi 0, %s56
      %s57 = sphi 0, %s54
      %s58 = sphi 0, %s57
      %s74 = sphi 0, %s58
      %s80 = sphi 0, %s82
      %s83 = sphi 0, %s80
      %s84 = sphi 0, %s83
      %s100 = sphi 0, %s84
      %s104 = sphi 0, %s104
      %s106 = sphi 0, %s104
      %s107 = sphi 0, %s106
      %s121 = sphi 0, %s107
      %s125 = sphi 0, %s125
      %s127 = sphi 0, %s125
      %s128 = sphi 0, %s127
      %s142 = sphi 0, %s128
      %s146 = sphi 0, %s146
      %s148 = sphi 0, %s146
      %s149 = sphi 0, %s148
      %s163 = sphi 0, %s149
      %s167 = sphi 0, %s167
      %s169 = sphi 0, %s167
      %s170 = sphi 0, %s169
      %s184 = sphi 0, %s170
      %s188 = sphi 0, %s188
      %s190 = sphi 0, %s188
      %s191 = sphi 0, %s190
      %s205 = sphi 0, %s191
      %s209 = sphi 0, %s209
      %s211 = sphi 0, %s209
      %s212 = sphi 0, %s211
      %s226 = sphi 0, %s212
      %s230 = sphi 0, %s230
      %s232 = sphi 0, %s230
      %s233 = sphi 0, %s232
      %s247 = sphi 0, %s233
      %s251 = sphi 0, %s251
      %s253 = sphi 0, %s251
      %s254 = sphi 0, %s253
      %s268 = sphi 0, %s254
      %s272 = sphi 0, %s272
      %s274 = sphi 0, %s272
      %s275 = sphi 0, %s274
      %s289 = sphi 0, %s275
      %s293 = sphi 0, %s293
      %s295 = sphi 0, %s293
      %s296 = sphi 0, %s295
      %s310 = sphi 0, %s296
      %s314 = sphi 0, %s314
      %s316 = sphi 0, %s314
      %s317 = sphi 0, %s316
      %s331 = sphi 0, %s317
      %s335 = sphi 0, %s335
      %s337 = sphi 0, %s335
      %s338 = sphi 0, %s337
      %s352 = sphi 0, %s338
      %s356 = sphi 0, %s356
      %s358 = sphi 0, %s356
      %s359 = sphi 0, %s358
      %s373 = sphi 0, %s359
      %s377 = sphi 0, %s377
      %s379 = sphi 0, %s377
      %s380 = sphi 0, %s379
      %s394 = sphi 0, %s380
      %s398 = sphi 0, %s398
      %s400 = sphi 0, %s398
      %s401 = sphi 0, %s400
      %s415 = sphi 0, %s401
      %s419 = sphi 0, %s419
      %s421 = sphi 0, %s419
      %s422 = sphi 0, %s421
      %s436 = sphi 0, %s422
      %s444 = sphi 0, %s446
      %s447 = sphi 0, %s444
      %s448 = sphi 0, %s447
      %s464 = sphi 0, %s448
    $region4: #{tpu_custom_call.1} parent=1 // loop_header_branch
      %33 = sbr.rel (%p31) target = $region8
    $region5: #{tpu_custom_call.1} parent=1 // loop_body
      %s35 = ssub.s32 %s30, 1
      %s36 = ssub.s32 %s30, 2
      %s43 = sadd.s32 1, %s38
      %p44 = scmp.ge.s32.totalorder %s43, 1
      %s45 = scalar_select %p44, 0, %s43
      %s46 = sadd.s32 1, %s37
      %s47 = scalar_select %p44, %s46, %s37
      %p48 = scmp.ge.s32.totalorder %s47, 2
      %s49 = scalar_select %p48, 0, %s47
      %s50 = ssub.s32 %s37, %s49
      %s51 = ssub.s32 %s38, %s45
      %s52 = sor.u32 %s50, %s51
      %p53 = scmp.eq.s32.totalorder %s52, 0
      %s55 = sadd.s32 %s54, 1
      %s56 = scalar_select %p53, %s54, %s55
      %p59 = pneg %p53
      %p60 = scmp.eq.s32.totalorder %s30, 1
      %p61 = por %p59, %p60
      %p62 = scmp.ne.s32.totalorder %s54, %s57
      %p63 = scmp.eq.s32.totalorder %s30, 0
      %p64 = por %p62, %p63
      %p65 = scmp.ne.s32.totalorder %s54, %s57
      %p66 = scmp.eq.s32.totalorder %s35, 1
      %p67 = por %p65, %p66
      %p68 = scmp.ne.s32.totalorder %s57, %s58
      %p69 = scmp.eq.s32.totalorder %s35, 0
      %p70 = por %p68, %p69
      %p71 = scmp.ne.s32.totalorder %s57, %s58
      %p72 = scmp.eq.s32.totalorder %s36, 1
      %p73 = por %p71, %p72
      %p75 = scmp.ne.s32.totalorder %s58, %s74
      %p76 = scmp.eq.s32.totalorder %s36, 0
      %p77 = por %p75, %p76
      %s78 = ssub.s32 %s37, %s49
      %p79 = scmp.eq.s32.totalorder %s78, 0
      %s81 = sadd.s32 %s80, 1
      %s82 = scalar_select %p79, %s80, %s81
      %p85 = pneg %p79
      %p86 = scmp.eq.s32.totalorder %s30, 1
      %p87 = por %p85, %p86
      %p88 = scmp.ne.s32.totalorder %s80, %s83
      %p89 = scmp.eq.s32.totalorder %s30, 0
      %p90 = por %p88, %p89
      %p91 = scmp.ne.s32.totalorder %s80, %s83
      %p92 = scmp.eq.s32.totalorder %s35, 1
      %p93 = por %p91, %p92
      %p94 = scmp.ne.s32.totalorder %s83, %s84
      %p95 = scmp.eq.s32.totalorder %s35, 0
      %p96 = por %p94, %p95
      %p97 = scmp.ne.s32.totalorder %s83, %s84
      %p98 = scmp.eq.s32.totalorder %s36, 1
      %p99 = por %p97, %p98
      %p101 = scmp.ne.s32.totalorder %s84, %s100
      %p102 = scmp.eq.s32.totalorder %s36, 0
      %p103 = por %p101, %p102
      %s105 = sadd.s32 %s104, 1
      %p108 = scmp.eq.s32.totalorder %s30, 1
      %p109 = scmp.ne.s32.totalorder %s104, %s106
      %p110 = scmp.eq.s32.totalorder %s30, 0
      %p111 = por %p109, %p110
      %p112 = scmp.ne.s32.totalorder %s104, %s106
      %p113 = scmp.eq.s32.totalorder %s35, 1
      %p114 = por %p112, %p113
      %p115 = scmp.ne.s32.totalorder %s106, %s107
      %p116 = scmp.eq.s32.totalorder %s35, 0
      %p117 = por %p115, %p116
      %p118 = scmp.ne.s32.totalorder %s106, %s107
      %p119 = scmp.eq.s32.totalorder %s36, 1
      %p120 = por %p118, %p119
      %p122 = scmp.ne.s32.totalorder %s107, %s121
      %p123 = scmp.eq.s32.totalorder %s36, 0
      %p124 = por %p122, %p123
      %s126 = sadd.s32 %s125, 1
      %p129 = scmp.eq.s32.totalorder %s30, 1
      %p130 = scmp.ne.s32.totalorder %s125, %s127
      %p131 = scmp.eq.s32.totalorder %s30, 0
      %p132 = por %p130, %p131
      %p133 = scmp.ne.s32.totalorder %s125, %s127
      %p134 = scmp.eq.s32.totalorder %s35, 1
      %p135 = por %p133, %p134
      %p136 = scmp.ne.s32.totalorder %s127, %s128
      %p137 = scmp.eq.s32.totalorder %s35, 0
      %p138 = por %p136, %p137
      %p139 = scmp.ne.s32.totalorder %s127, %s128
      %p140 = scmp.eq.s32.totalorder %s36, 1
      %p141 = por %p139, %p140
      %p143 = scmp.ne.s32.totalorder %s128, %s142
      %p144 = scmp.eq.s32.totalorder %s36, 0
      %p145 = por %p143, %p144
      %s147 = sadd.s32 %s146, 1
      %p150 = scmp.eq.s32.totalorder %s30, 1
      %p151 = scmp.ne.s32.totalorder %s146, %s148
      %p152 = scmp.eq.s32.totalorder %s30, 0
      %p153 = por %p151, %p152
      %p154 = scmp.ne.s32.totalorder %s146, %s148
      %p155 = scmp.eq.s32.totalorder %s35, 1
      %p156 = por %p154, %p155
      %p157 = scmp.ne.s32.totalorder %s148, %s149
      %p158 = scmp.eq.s32.totalorder %s35, 0
      %p159 = por %p157, %p158
      %p160 = scmp.ne.s32.totalorder %s148, %s149
      %p161 = scmp.eq.s32.totalorder %s36, 1
      %p162 = por %p160, %p161
      %p164 = scmp.ne.s32.totalorder %s149, %s163
      %p165 = scmp.eq.s32.totalorder %s36, 0
      %p166 = por %p164, %p165
      %s168 = sadd.s32 %s167, 1
      %p171 = scmp.eq.s32.totalorder %s30, 1
      %p172 = scmp.ne.s32.totalorder %s167, %s169
      %p173 = scmp.eq.s32.totalorder %s30, 0
      %p174 = por %p172, %p173
      %p175 = scmp.ne.s32.totalorder %s167, %s169
      %p176 = scmp.eq.s32.totalorder %s35, 1
      %p177 = por %p175, %p176
      %p178 = scmp.ne.s32.totalorder %s169, %s170
      %p179 = scmp.eq.s32.totalorder %s35, 0
      %p180 = por %p178, %p179
      %p181 = scmp.ne.s32.totalorder %s169, %s170
      %p182 = scmp.eq.s32.totalorder %s36, 1
      %p183 = por %p181, %p182
      %p185 = scmp.ne.s32.totalorder %s170, %s184
      %p186 = scmp.eq.s32.totalorder %s36, 0
      %p187 = por %p185, %p186
      %s189 = sadd.s32 %s188, 1
      %p192 = scmp.eq.s32.totalorder %s30, 1
      %p193 = scmp.ne.s32.totalorder %s188, %s190
      %p194 = scmp.eq.s32.totalorder %s30, 0
      %p195 = por %p193, %p194
      %p196 = scmp.ne.s32.totalorder %s188, %s190
      %p197 = scmp.eq.s32.totalorder %s35, 1
      %p198 = por %p196, %p197
      %p199 = scmp.ne.s32.totalorder %s190, %s191
      %p200 = scmp.eq.s32.totalorder %s35, 0
      %p201 = por %p199, %p200
      %p202 = scmp.ne.s32.totalorder %s190, %s191
      %p203 = scmp.eq.s32.totalorder %s36, 1
      %p204 = por %p202, %p203
      %p206 = scmp.ne.s32.totalorder %s191, %s205
      %p207 = scmp.eq.s32.totalorder %s36, 0
      %p208 = por %p206, %p207
      %s210 = sadd.s32 %s209, 1
      %p213 = scmp.eq.s32.totalorder %s30, 1
      %p214 = scmp.ne.s32.totalorder %s209, %s211
      %p215 = scmp.eq.s32.totalorder %s30, 0
      %p216 = por %p214, %p215
      %p217 = scmp.ne.s32.totalorder %s209, %s211
      %p218 = scmp.eq.s32.totalorder %s35, 1
      %p219 = por %p217, %p218
      %p220 = scmp.ne.s32.totalorder %s211, %s212
      %p221 = scmp.eq.s32.totalorder %s35, 0
      %p222 = por %p220, %p221
      %p223 = scmp.ne.s32.totalorder %s211, %s212
      %p224 = scmp.eq.s32.totalorder %s36, 1
      %p225 = por %p223, %p224
      %p227 = scmp.ne.s32.totalorder %s212, %s226
      %p228 = scmp.eq.s32.totalorder %s36, 0
      %p229 = por %p227, %p228
      %s231 = sadd.s32 %s230, 1
      %p234 = scmp.eq.s32.totalorder %s30, 1
      %p235 = scmp.ne.s32.totalorder %s230, %s232
      %p236 = scmp.eq.s32.totalorder %s30, 0
      %p237 = por %p235, %p236
      %p238 = scmp.ne.s32.totalorder %s230, %s232
      %p239 = scmp.eq.s32.totalorder %s35, 1
      %p240 = por %p238, %p239
      %p241 = scmp.ne.s32.totalorder %s232, %s233
      %p242 = scmp.eq.s32.totalorder %s35, 0
      %p243 = por %p241, %p242
      %p244 = scmp.ne.s32.totalorder %s232, %s233
      %p245 = scmp.eq.s32.totalorder %s36, 1
      %p246 = por %p244, %p245
      %p248 = scmp.ne.s32.totalorder %s233, %s247
      %p249 = scmp.eq.s32.totalorder %s36, 0
      %p250 = por %p248, %p249
      %s252 = sadd.s32 %s251, 1
      %p255 = scmp.eq.s32.totalorder %s30, 1
      %p256 = scmp.ne.s32.totalorder %s251, %s253
      %p257 = scmp.eq.s32.totalorder %s30, 0
      %p258 = por %p256, %p257
      %p259 = scmp.ne.s32.totalorder %s251, %s253
      %p260 = scmp.eq.s32.totalorder %s35, 1
      %p261 = por %p259, %p260
      %p262 = scmp.ne.s32.totalorder %s253, %s254
      %p263 = scmp.eq.s32.totalorder %s35, 0
      %p264 = por %p262, %p263
      %p265 = scmp.ne.s32.totalorder %s253, %s254
      %p266 = scmp.eq.s32.totalorder %s36, 1
      %p267 = por %p265, %p266
      %p269 = scmp.ne.s32.totalorder %s254, %s268
      %p270 = scmp.eq.s32.totalorder %s36, 0
      %p271 = por %p269, %p270
      %s273 = sadd.s32 %s272, 1
      %p276 = scmp.eq.s32.totalorder %s30, 1
      %p277 = scmp.ne.s32.totalorder %s272, %s274
      %p278 = scmp.eq.s32.totalorder %s30, 0
      %p279 = por %p277, %p278
      %p280 = scmp.ne.s32.totalorder %s272, %s274
      %p281 = scmp.eq.s32.totalorder %s35, 1
      %p282 = por %p280, %p281
      %p283 = scmp.ne.s32.totalorder %s274, %s275
      %p284 = scmp.eq.s32.totalorder %s35, 0
      %p285 = por %p283, %p284
      %p286 = scmp.ne.s32.totalorder %s274, %s275
      %p287 = scmp.eq.s32.totalorder %s36, 1
      %p288 = por %p286, %p287
      %p290 = scmp.ne.s32.totalorder %s275, %s289
      %p291 = scmp.eq.s32.totalorder %s36, 0
      %p292 = por %p290, %p291
      %s294 = sadd.s32 %s293, 1
      %p297 = scmp.eq.s32.totalorder %s30, 1
      %p298 = scmp.ne.s32.totalorder %s293, %s295
      %p299 = scmp.eq.s32.totalorder %s30, 0
      %p300 = por %p298, %p299
      %p301 = scmp.ne.s32.totalorder %s293, %s295
      %p302 = scmp.eq.s32.totalorder %s35, 1
      %p303 = por %p301, %p302
      %p304 = scmp.ne.s32.totalorder %s295, %s296
      %p305 = scmp.eq.s32.totalorder %s35, 0
      %p306 = por %p304, %p305
      %p307 = scmp.ne.s32.totalorder %s295, %s296
      %p308 = scmp.eq.s32.totalorder %s36, 1
      %p309 = por %p307, %p308
      %p311 = scmp.ne.s32.totalorder %s296, %s310
      %p312 = scmp.eq.s32.totalorder %s36, 0
      %p313 = por %p311, %p312
      %s315 = sadd.s32 %s314, 1
      %p318 = scmp.eq.s32.totalorder %s30, 1
      %p319 = scmp.ne.s32.totalorder %s314, %s316
      %p320 = scmp.eq.s32.totalorder %s30, 0
      %p321 = por %p319, %p320
      %p322 = scmp.ne.s32.totalorder %s314, %s316
      %p323 = scmp.eq.s32.totalorder %s35, 1
      %p324 = por %p322, %p323
      %p325 = scmp.ne.s32.totalorder %s316, %s317
      %p326 = scmp.eq.s32.totalorder %s35, 0
      %p327 = por %p325, %p326
      %p328 = scmp.ne.s32.totalorder %s316, %s317
      %p329 = scmp.eq.s32.totalorder %s36, 1
      %p330 = por %p328, %p329
      %p332 = scmp.ne.s32.totalorder %s317, %s331
      %p333 = scmp.eq.s32.totalorder %s36, 0
      %p334 = por %p332, %p333
      %s336 = sadd.s32 %s335, 1
      %p339 = scmp.eq.s32.totalorder %s30, 1
      %p340 = scmp.ne.s32.totalorder %s335, %s337
      %p341 = scmp.eq.s32.totalorder %s30, 0
      %p342 = por %p340, %p341
      %p343 = scmp.ne.s32.totalorder %s335, %s337
      %p344 = scmp.eq.s32.totalorder %s35, 1
      %p345 = por %p343, %p344
      %p346 = scmp.ne.s32.totalorder %s337, %s338
      %p347 = scmp.eq.s32.totalorder %s35, 0
      %p348 = por %p346, %p347
      %p349 = scmp.ne.s32.totalorder %s337, %s338
      %p350 = scmp.eq.s32.totalorder %s36, 1
      %p351 = por %p349, %p350
      %p353 = scmp.ne.s32.totalorder %s338, %s352
      %p354 = scmp.eq.s32.totalorder %s36, 0
      %p355 = por %p353, %p354
      %s357 = sadd.s32 %s356, 1
      %p360 = scmp.eq.s32.totalorder %s30, 1
      %p361 = scmp.ne.s32.totalorder %s356, %s358
      %p362 = scmp.eq.s32.totalorder %s30, 0
      %p363 = por %p361, %p362
      %p364 = scmp.ne.s32.totalorder %s356, %s358
      %p365 = scmp.eq.s32.totalorder %s35, 1
      %p366 = por %p364, %p365
      %p367 = scmp.ne.s32.totalorder %s358, %s359
      %p368 = scmp.eq.s32.totalorder %s35, 0
      %p369 = por %p367, %p368
      %p370 = scmp.ne.s32.totalorder %s358, %s359
      %p371 = scmp.eq.s32.totalorder %s36, 1
      %p372 = por %p370, %p371
      %p374 = scmp.ne.s32.totalorder %s359, %s373
      %p375 = scmp.eq.s32.totalorder %s36, 0
      %p376 = por %p374, %p375
      %s378 = sadd.s32 %s377, 1
      %p381 = scmp.eq.s32.totalorder %s30, 1
      %p382 = scmp.ne.s32.totalorder %s377, %s379
      %p383 = scmp.eq.s32.totalorder %s30, 0
      %p384 = por %p382, %p383
      %p385 = scmp.ne.s32.totalorder %s377, %s379
      %p386 = scmp.eq.s32.totalorder %s35, 1
      %p387 = por %p385, %p386
      %p388 = scmp.ne.s32.totalorder %s379, %s380
      %p389 = scmp.eq.s32.totalorder %s35, 0
      %p390 = por %p388, %p389
      %p391 = scmp.ne.s32.totalorder %s379, %s380
      %p392 = scmp.eq.s32.totalorder %s36, 1
      %p393 = por %p391, %p392
      %p395 = scmp.ne.s32.totalorder %s380, %s394
      %p396 = scmp.eq.s32.totalorder %s36, 0
      %p397 = por %p395, %p396
      %s399 = sadd.s32 %s398, 1
      %p402 = scmp.eq.s32.totalorder %s30, 1
      %p403 = scmp.ne.s32.totalorder %s398, %s400
      %p404 = scmp.eq.s32.totalorder %s30, 0
      %p405 = por %p403, %p404
      %p406 = scmp.ne.s32.totalorder %s398, %s400
      %p407 = scmp.eq.s32.totalorder %s35, 1
      %p408 = por %p406, %p407
      %p409 = scmp.ne.s32.totalorder %s400, %s401
      %p410 = scmp.eq.s32.totalorder %s35, 0
      %p411 = por %p409, %p410
      %p412 = scmp.ne.s32.totalorder %s400, %s401
      %p413 = scmp.eq.s32.totalorder %s36, 1
      %p414 = por %p412, %p413
      %p416 = scmp.ne.s32.totalorder %s401, %s415
      %p417 = scmp.eq.s32.totalorder %s36, 0
      %p418 = por %p416, %p417
      %s420 = sadd.s32 %s419, 1
      %p423 = scmp.eq.s32.totalorder %s30, 1
      %p424 = scmp.ne.s32.totalorder %s419, %s421
      %p425 = scmp.eq.s32.totalorder %s30, 0
      %p426 = por %p424, %p425
      %p427 = scmp.ne.s32.totalorder %s419, %s421
      %p428 = scmp.eq.s32.totalorder %s35, 1
      %p429 = por %p427, %p428
      %p430 = scmp.ne.s32.totalorder %s421, %s422
      %p431 = scmp.eq.s32.totalorder %s35, 0
      %p432 = por %p430, %p431
      %p433 = scmp.ne.s32.totalorder %s421, %s422
      %p434 = scmp.eq.s32.totalorder %s36, 1
      %p435 = por %p433, %p434
      %p437 = scmp.ne.s32.totalorder %s422, %s436
      %p438 = scmp.eq.s32.totalorder %s36, 0
      %p439 = por %p437, %p438
      %s440 = ssub.s32 %s37, %s49
      %s441 = ssub.s32 %s38, %s45
      %s442 = sor.u32 %s440, %s441
      %p443 = scmp.eq.s32.totalorder %s442, 0
      %s445 = sadd.s32 %s444, 1
      %s446 = scalar_select %p443, %s444, %s445
      %p449 = pneg %p443
      %p450 = scmp.eq.s32.totalorder %s30, 1
      %p451 = por %p449, %p450
      %p452 = scmp.ne.s32.totalorder %s444, %s447
      %p453 = scmp.eq.s32.totalorder %s30, 0
      %p454 = por %p452, %p453
      %p455 = scmp.ne.s32.totalorder %s444, %s447
      %p456 = scmp.eq.s32.totalorder %s35, 1
      %p457 = por %p455, %p456
      %p458 = scmp.ne.s32.totalorder %s447, %s448
      %p459 = scmp.eq.s32.totalorder %s35, 0
      %p460 = por %p458, %p459
      %p461 = scmp.ne.s32.totalorder %s447, %s448
      %p462 = scmp.eq.s32.totalorder %s36, 1
      %p463 = por %p461, %p462
      %p465 = scmp.ne.s32.totalorder %s448, %s464
      %p466 = scmp.eq.s32.totalorder %s36, 0
      %p467 = por %p465, %p466
      %p468 = scmp.le.s32.totalorder 1, %s30
      %p469 = scmp.lt.s32.totalorder %s30, 3
      %p470 = pnand %p468, %p469
      %p471 = pneg %p470
      // Predicated region
      $region9: #{tpu_custom_call.1} parent=5 // pred_check
        _
      $region10: #{tpu_custom_call.1} parent=5 // pred_check_branch
        %473 = sbr.rel (%p470) target = $region12
      $region11: #{tpu_custom_call.1} parent=5 // pred_region
        %s474 = ssub.s32 %s30, 1
        // Predicated region
        $region13: #{tpu_custom_call.1} parent=11 // pred_check
          %p475 = pneg %p117
        $region14: #{tpu_custom_call.1} parent=11 // pred_check_branch
          %477 = sbr.rel (%p475) target = $region16
        $region15: #{tpu_custom_call.1} parent=11 // pred_region
          _
        $region16: #{tpu_custom_call.1} parent=11 // pred_fallthru
          _
        // Predicated region
        $region17: #{tpu_custom_call.1} parent=11 // pred_check
          %p478 = pneg %p138
        $region18: #{tpu_custom_call.1} parent=11 // pred_check_branch
          %480 = sbr.rel (%p478) target = $region20
        $region19: #{tpu_custom_call.1} parent=11 // pred_region
          _
        $region20: #{tpu_custom_call.1} parent=11 // pred_fallthru
          _
        // Predicated region
        $region21: #{tpu_custom_call.1} parent=11 // pred_check
          %p481 = pneg %p159
        $region22: #{tpu_custom_call.1} parent=11 // pred_check_branch
          %483 = sbr.rel (%p481) target = $region24
        $region23: #{tpu_custom_call.1} parent=11 // pred_region
          _
        $region24: #{tpu_custom_call.1} parent=11 // pred_fallthru
          _
        // Predicated region
        $region25: #{tpu_custom_call.1} parent=11 // pred_check
          %p484 = pneg %p180
        $region26: #{tpu_custom_call.1} parent=11 // pred_check_branch
          %486 = sbr.rel (%p484) target = $region28
        $region27: #{tpu_custom_call.1} parent=11 // pred_region
          _
        $region28: #{tpu_custom_call.1} parent=11 // pred_fallthru
          _
        // Predicated region
        $region29: #{tpu_custom_call.1} parent=11 // pred_check
          %p487 = pneg %p201
        $region30: #{tpu_custom_call.1} parent=11 // pred_check_branch
          %489 = sbr.rel (%p487) target = $region32
        $region31: #{tpu_custom_call.1} parent=11 // pred_region
          %491 = vsyncadd [#allocation3], 0
          %s492 = sshll.u32 %s6, 4
          %s493 = int_to_ptr.hbm [resolvable:$true] %s492
          %s494 = sshll.u32 [#allocation2], 4
          %s495 = int_to_ptr.vmem [resolvable:$true] %s494
          %500 = dma.hbm_to_vmem [thread:$0]  %s493, 256, %s495, [#allocation3], 64, 64, 4
        $region32: #{tpu_custom_call.1} parent=11 // pred_fallthru
          _
        // Predicated region
        $region33: #{tpu_custom_call.1} parent=11 // pred_check
          %p501 = pneg %p222
        $region34: #{tpu_custom_call.1} parent=11 // pred_check_branch
          %503 = sbr.rel (%p501) target = $region36
        $region35: #{tpu_custom_call.1} parent=11 // pred_region
          _
        $region36: #{tpu_custom_call.1} parent=11 // pred_fallthru
          _
        // Predicated region
        $region37: #{tpu_custom_call.1} parent=11 // pred_check
          %p504 = pneg %p243
        $region38: #{tpu_custom_call.1} parent=11 // pred_check_branch
          %506 = sbr.rel (%p504) target = $region40
        $region39: #{tpu_custom_call.1} parent=11 // pred_region
          %508 = vsyncadd [#allocation6], 0
          %s509 = sshll.u32 %s8, 4
          %s510 = int_to_ptr.hbm [resolvable:$true] %s509
          %s511 = sshll.u32 [#allocation5], 4
          %s512 = int_to_ptr.vmem [resolvable:$true] %s511
          %517 = dma.hbm_to_vmem [thread:$0]  %s510, 256, %s512, [#allocation6], 64, 64, 4
        $region40: #{tpu_custom_call.1} parent=11 // pred_fallthru
          _
        // Predicated region
        $region41: #{tpu_custom_call.1} parent=11 // pred_check
          %p518 = pneg %p264
        $region42: #{tpu_custom_call.1} parent=11 // pred_check_branch
          %520 = sbr.rel (%p518) target = $region44
        $region43: #{tpu_custom_call.1} parent=11 // pred_region
          _
        $region44: #{tpu_custom_call.1} parent=11 // pred_fallthru
          _
        // Predicated region
        $region45: #{tpu_custom_call.1} parent=11 // pred_check
          %p521 = pneg %p285
        $region46: #{tpu_custom_call.1} parent=11 // pred_check_branch
          %523 = sbr.rel (%p521) target = $region48
        $region47: #{tpu_custom_call.1} parent=11 // pred_region
          %525 = vsyncadd [#allocation6], 0
          %s526 = sshll.u32 %s10, 4
          %s527 = int_to_ptr.hbm [resolvable:$true] %s526
          %s528 = sshll.u32 [#allocation7], 4
          %s529 = int_to_ptr.vmem [resolvable:$true] %s528
          %534 = dma.hbm_to_vmem [thread:$0]  %s527, 256, %s529, [#allocation6], 64, 64, 4
        $region48: #{tpu_custom_call.1} parent=11 // pred_fallthru
          _
        // Predicated region
        $region49: #{tpu_custom_call.1} parent=11 // pred_check
          %p535 = pneg %p306
        $region50: #{tpu_custom_call.1} parent=11 // pred_check_branch
          %537 = sbr.rel (%p535) target = $region52
        $region51: #{tpu_custom_call.1} parent=11 // pred_region
          _
        $region52: #{tpu_custom_call.1} parent=11 // pred_fallthru
          _
        // Predicated region
        $region53: #{tpu_custom_call.1} parent=11 // pred_check
          %p538 = pneg %p327
        $region54: #{tpu_custom_call.1} parent=11 // pred_check_branch
          %540 = sbr.rel (%p538) target = $region56
        $region55: #{tpu_custom_call.1} parent=11 // pred_region
          _
        $region56: #{tpu_custom_call.1} parent=11 // pred_fallthru
          _
        // Predicated region
        $region57: #{tpu_custom_call.1} parent=11 // pred_check
          %p541 = pneg %p348
        $region58: #{tpu_custom_call.1} parent=11 // pred_check_branch
          %543 = sbr.rel (%p541) target = $region60
        $region59: #{tpu_custom_call.1} parent=11 // pred_region
          _
        $region60: #{tpu_custom_call.1} parent=11 // pred_fallthru
          _
        // Predicated region
        $region61: #{tpu_custom_call.1} parent=11 // pred_check
          %p544 = pneg %p369
        $region62: #{tpu_custom_call.1} parent=11 // pred_check_branch
          %546 = sbr.rel (%p544) target = $region64
        $region63: #{tpu_custom_call.1} parent=11 // pred_region
          %548 = vsyncadd [#allocation9], 0
          %s549 = sshll.u32 %s14, 4
          %s550 = int_to_ptr.hbm [resolvable:$true] %s549
          %s551 = sshll.u32 [#allocation8], 4
          %s552 = int_to_ptr.vmem [resolvable:$true] %s551
          %557 = dma.hbm_to_vmem [thread:$0]  %s550, 256, %s552, [#allocation9], 64, 64, 4
        $region64: #{tpu_custom_call.1} parent=11 // pred_fallthru
          _
        // Predicated region
        $region65: #{tpu_custom_call.1} parent=11 // pred_check
          %p558 = pneg %p390
        $region66: #{tpu_custom_call.1} parent=11 // pred_check_branch
          %560 = sbr.rel (%p558) target = $region68
        $region67: #{tpu_custom_call.1} parent=11 // pred_region
          _
        $region68: #{tpu_custom_call.1} parent=11 // pred_fallthru
          _
        // Predicated region
        $region69: #{tpu_custom_call.1} parent=11 // pred_check
          %p561 = pneg %p411
        $region70: #{tpu_custom_call.1} parent=11 // pred_check_branch
          %563 = sbr.rel (%p561) target = $region72
        $region71: #{tpu_custom_call.1} parent=11 // pred_region
          _
        $region72: #{tpu_custom_call.1} parent=11 // pred_fallthru
          _
        // Predicated region
        $region73: #{tpu_custom_call.1} parent=11 // pred_check
          %p564 = pneg %p432
        $region74: #{tpu_custom_call.1} parent=11 // pred_check_branch
          %566 = sbr.rel (%p564) target = $region76
        $region75: #{tpu_custom_call.1} parent=11 // pred_region
          _
        $region76: #{tpu_custom_call.1} parent=11 // pred_fallthru
          _
      $region12: #{tpu_custom_call.1} parent=5 // pred_fallthru
        _
      %p567 = scmp.lt.s32.totalorder %s30, 2
      // Predicated region
      $region77: #{tpu_custom_call.1} parent=5 // pred_check
        %p568 = pneg %p567
      $region78: #{tpu_custom_call.1} parent=5 // pred_check_branch
        %570 = sbr.rel (%p568) target = $region80
      $region79: #{tpu_custom_call.1} parent=5 // pred_region
        // Predicated region
        $region81: #{tpu_custom_call.1} parent=79 // pred_check
          %p571 = pneg %p64
        $region82: #{tpu_custom_call.1} parent=79 // pred_check_branch
          %573 = sbr.rel (%p571) target = $region84
        $region83: #{tpu_custom_call.1} parent=79 // pred_region
          %p574 = scmp.lt.s32.totalorder %s37, 1
          %s575 = scalar_select %p574, %s37, 1
          %p576 = scmp.lt.s32.totalorder %s38, 0
          %s577 = scalar_select %p576, %s38, 0
          %s578 = sadd.s32 %s577, %s575
          %s579 = smul.addr %s578, 8
          %s580 = scalar_lea.vmem %s0, %s579
        $region84: #{tpu_custom_call.1} parent=79 // pred_fallthru
          _
        // Predicated region
        $region85: #{tpu_custom_call.1} parent=79 // pred_check
          %p581 = pneg %p90
        $region86: #{tpu_custom_call.1} parent=79 // pred_check_branch
          %583 = sbr.rel (%p581) target = $region88
        $region87: #{tpu_custom_call.1} parent=79 // pred_region
          %p584 = scmp.lt.s32.totalorder %s37, 1
          %s585 = scalar_select %p584, %s37, 1
          %s586 = smul.addr %s585, 8
          %s587 = scalar_lea.vmem %s1, %s586
        $region88: #{tpu_custom_call.1} parent=79 // pred_fallthru
          _
      $region80: #{tpu_custom_call.1} parent=5 // pred_fallthru
        _
      %p588 = scmp.le.s32.totalorder 1, %s30
      %p589 = scmp.lt.s32.totalorder %s30, 3
      %p590 = pnand %p588, %p589
      %p591 = pneg %p590
      // Predicated region
      $region89: #{tpu_custom_call.1} parent=5 // pred_check
        _
      $region90: #{tpu_custom_call.1} parent=5 // pred_check_branch
        %593 = sbr.rel (%p590) target = $region92
      $region91: #{tpu_custom_call.1} parent=5 // pred_region
        %s594 = ssub.s32 %s30, 1
        // Predicated region
        $region93: #{tpu_custom_call.1} parent=91 // pred_check
          %p595 = pneg %p201
        $region94: #{tpu_custom_call.1} parent=91 // pred_check_branch
          %597 = sbr.rel (%p595) target = $region96
        $region95: #{tpu_custom_call.1} parent=91 // pred_region
          %599 = dma.done [#allocation3], 256
        $region96: #{tpu_custom_call.1} parent=91 // pred_fallthru
          _
        // Predicated region
        $region97: #{tpu_custom_call.1} parent=91 // pred_check
          %p600 = pneg %p243
        $region98: #{tpu_custom_call.1} parent=91 // pred_check_branch
          %602 = sbr.rel (%p600) target = $region100
        $region99: #{tpu_custom_call.1} parent=91 // pred_region
          %604 = dma.done [#allocation6], 256
        $region100: #{tpu_custom_call.1} parent=91 // pred_fallthru
          _
        // Predicated region
        $region101: #{tpu_custom_call.1} parent=91 // pred_check
          %p605 = pneg %p285
        $region102: #{tpu_custom_call.1} parent=91 // pred_check_branch
          %607 = sbr.rel (%p605) target = $region104
        $region103: #{tpu_custom_call.1} parent=91 // pred_region
          %609 = dma.done [#allocation6], 256
        $region104: #{tpu_custom_call.1} parent=91 // pred_fallthru
          _
        // Predicated region
        $region105: #{tpu_custom_call.1} parent=91 // pred_check
          %p610 = pneg %p369
        $region106: #{tpu_custom_call.1} parent=91 // pred_check_branch
          %612 = sbr.rel (%p610) target = $region108
        $region107: #{tpu_custom_call.1} parent=91 // pred_region
          %614 = dma.done [#allocation9], 256
        $region108: #{tpu_custom_call.1} parent=91 // pred_fallthru
          _
        %p615 = scmp.lt.s32.totalorder %s39, 1
        %s616 = scalar_select %p615, %s39, 1
        %p617 = scmp.lt.s32.totalorder %s40, 0
        %s618 = scalar_select %p617, %s40, 0
        %s619 = sadd.s32 %s618, %s616
        %s620 = smul.addr %s619, 8
        %s621 = scalar_lea.vmem %s0, %s620
        %p622 = pneg %p70
        %p623 = pneg %p67
        %p624 = scmp.lt.s32.totalorder %s39, 1
        %s625 = scalar_select %p624, %s39, 1
        %s626 = smul.addr %s625, 8
        %s627 = scalar_lea.vmem %s1, %s626
        %p628 = pneg %p96
        %p629 = pneg %p93
        %p630 = pneg %p117
        %p631 = pneg %p114
        %p632 = pneg %p138
        %p633 = pneg %p135
        %p634 = pneg %p159
        %p635 = pneg %p156
        %p636 = pneg %p180
        %p637 = pneg %p177
        %p638 = pneg %p201
        %p639 = pneg %p198
        %p640 = pneg %p222
        %p641 = pneg %p219
        %p642 = pneg %p243
        %p643 = pneg %p240
        %p644 = pneg %p264
        %p645 = pneg %p261
        %p646 = pneg %p285
        %p647 = pneg %p282
        %p648 = pneg %p306
        %p649 = pneg %p303
        %p650 = pneg %p327
        %p651 = pneg %p324
        %p652 = pneg %p348
        %p653 = pneg %p345
        %p654 = pneg %p369
        %p655 = pneg %p366
        %p656 = pneg %p390
        %p657 = pneg %p387
        %p658 = pneg %p411
        %p659 = pneg %p408
        %p660 = pneg %p432
        %p661 = pneg %p429
        %p662 = pneg %p460
        %p663 = pneg %p457
        %s664 = sand.u32 %s447, 1
        %s665 = scalar_lea.sflag [#allocation4], %s664
        %s666 = sand.u32 %s447, 1
        %s667 = smul.addr %s666, 8
        %s668 = scalar_lea.vmem [#allocation10], %s667
        %p669 = scmp.lt.s32.totalorder %s39, 1
        %s670 = scalar_select %p669, %s39, 1
        %p671 = scmp.lt.s32.totalorder %s40, 0
        %s672 = scalar_select %p671, %s40, 0
        %s673 = sadd.s32 %s672, %s670
        %s674 = smul.addr %s673, 8
        %s675 = scalar_lea.vmem %s0, %s674
        %p676 = scmp.lt.s32.totalorder %s39, 1
        %s677 = scalar_select %p676, %s39, 1
        %s678 = smul.addr %s677, 8
        %s679 = scalar_lea.vmem %s1, %s678
        %v681 = vld [vmem:[%s675] sm:$0xff]
        %v682 = vld [vmem:[%s679] sm:$0xff]
        %v683 = vld [vmem:[%s2] sm:$0x1]
        %v684 = vld [vmem:[%s3] sm:$0x1]
        %vm685 = vcmask 261120
        %v686 = vsel %vm685, %v681, 0.0
        %687 = vadd.xlane.f32.xlu0 %v686
        %v688 = vpop.xlane.xlu0 %687
        %v689 = vrcp.pop 32.0
        %v690 = vmul.f32 32.0, %v689
        %v691 = vsub.f32 1.0, %v690
        %v692 = vmul.f32 %v689, %v691
        %v693 = vadd.f32 %v689, %v692
        %vm694 = vweird.f32 %v689
        %v695 = vsel %vm694, %v689, %v693
        %v696 = vmul.f32 %v688, %v695
        %v697 = vsub.f32 %v681, %v696
        %v698 = vmul.f32 %v697, %v697
        %v699 = vsel %vm685, %v698, 0.0
        %700 = vadd.xlane.f32.xlu0 %v699
        %v701 = vpop.xlane.xlu0 %700
        %v702 = vmul.f32 %v701, %v695
        %v703 = vadd.f32 %v702, 1e-06
        %v704 = vrsqrt.pop %v703
        %v705 = vmul.f32 %v704, %v703
        %v706 = vmul.f32 %v705, %v704
        %v707 = vmul.f32 0.5, %v706
        %v708 = vsub.f32 1.5, %v707
        %v709 = vmul.f32 %v704, %v708
        %vm710 = vweird.f32 %v703
        %vm711 = vweird.f32 %v704
        %vm712 = vmor %vm710, %vm711
        %v713 = vsel %vm712, %v704, %v709
        %v714 = vmul.f32 %v697, %v713
        %v716 = vperm.slane %v683, 0
        %v718 = vmul.f32 %v714, %v716
        %v720 = vperm.slane %v684, 0
        %v722 = vadd.f32 %v718, %v720
        %v723 = vpack.c.bf16 %v722, %v722
        %v724 = vsel %vm685, %v682, 0.0
        %725 = vadd.xlane.f32.xlu0 %v724
        %v726 = vpop.xlane.xlu0 %725
        %v727 = vmul.f32 %v726, %v695
        %v728 = vsub.f32 %v682, %v727
        %v729 = vmul.f32 %v728, %v728
        %v730 = vsel %vm685, %v729, 0.0
        %731 = vadd.xlane.f32.xlu0 %v730
        %v732 = vpop.xlane.xlu0 %731
        %v733 = vmul.f32 %v732, %v695
        %v734 = vadd.f32 %v733, 1e-06
        %v735 = vrsqrt.pop %v734
        %v736 = vmul.f32 %v735, %v734
        %v737 = vmul.f32 %v736, %v735
        %v738 = vmul.f32 0.5, %v737
        %v739 = vsub.f32 1.5, %v738
        %v740 = vmul.f32 %v735, %v739
        %vm741 = vweird.f32 %v734
        %vm742 = vweird.f32 %v735
        %vm743 = vmor %vm741, %vm742
        %v744 = vsel %vm743, %v735, %v740
        %v745 = vmul.f32 %v728, %v744
        %v746 = vmul.f32 %v745, %v716
        %v747 = vadd.f32 %v746, %v720
        %v748 = vpack.c.bf16 %v747, %v747
        %v749 = vld [vmem:[%s4] sm:$0xf]
        %v750 = vld [vmem:[%s4 + $0x4] sm:$0xf]
        %v751 = vld [vmem:[%s4 + $0x8] sm:$0xf]
        %v752 = vld [vmem:[%s4 + $0xc] sm:$0xf]
        %v753 = vld [vmem:[%s5] sm:$0x1]
        %v755 = vperm.slane %v753, 0
        %v761 = vunpack.c.l.b16 %v749
        %v762 = vunpack.c.l.b16 %v750
        %v763 = vunpack.c.l.b16 %v751
        %v764 = vunpack.c.l.b16 %v752
        %v765 = vpack.c.b16 %v762, %v761
        %v766 = vpack.c.b16 %v764, %v763
        %v770 = vsel %vm685, %v723, 0
        %772 = vmatpush.bf16.msra.mxu0 0
        %773 = vmatpush.bf16.msra.mxu0 0
        %774 = vmatpush.bf16.msra.mxu0 0
        %775 = vmatpush.bf16.msra.mxu0 0
        %776 = vmatpush.bf16.msra.mxu0 0
        %777 = vmatpush.bf16.msra.mxu0 0
        %778 = vmatpush.bf16.msra.mxu0 %v766
        %779 = vmatpush.bf16.msra.mxu0 %v765
        %780 = vmatmul.bf16.gmra.mxu0 %v770
        %v781 = vpop.f32.mrf.mxu0
        %v782 = vadd.f32 %v755, %v781
        %v783 = vpop.f32.mrf.mxu0
        %784 = vdwg.mxu0
        %v785 = vld [vmem:[#allocation2] sm:$0xf]
        %v786 = vld [vmem:[#allocation2 + $0x4] sm:$0xf]
        %v787 = vld [vmem:[#allocation2 + $0x8] sm:$0xf]
        %v788 = vld [vmem:[#allocation2 + $0xc] sm:$0xf]
        %v789 = vld [vmem:[%s7] sm:$0x1]
        %v791 = vperm.slane %v789, 0
        %v797 = vunpack.c.l.b16 %v785
        %v798 = vunpack.c.l.b16 %v786
        %v799 = vunpack.c.l.b16 %v787
        %v800 = vunpack.c.l.b16 %v788
        %v801 = vpack.c.b16 %v798, %v797
        %v802 = vpack.c.b16 %v800, %v799
        %v806 = vsel %vm685, %v748, 0
        %808 = vmatpush.bf16.msra.mxu0 0
        %809 = vmatpush.bf16.msra.mxu0 0
        %810 = vmatpush.bf16.msra.mxu0 0
        %811 = vmatpush.bf16.msra.mxu0 0
        %812 = vmatpush.bf16.msra.mxu0 0
        %813 = vmatpush.bf16.msra.mxu0 0
        %814 = vmatpush.bf16.msra.mxu0 %v802
        %815 = vmatpush.bf16.msra.mxu0 %v801
        %816 = vmatmul.bf16.gmra.mxu0 %v806
        %v817 = vpop.f32.mrf.mxu0
        %v818 = vadd.f32 %v791, %v817
        %v819 = vpop.f32.mrf.mxu0
        %820 = vdwg.mxu0
        %v821 = vld [vmem:[#allocation5] sm:$0xf]
        %v822 = vld [vmem:[#allocation5 + $0x4] sm:$0xf]
        %v823 = vld [vmem:[#allocation5 + $0x8] sm:$0xf]
        %v824 = vld [vmem:[#allocation5 + $0xc] sm:$0xf]
        %v825 = vld [vmem:[%s9] sm:$0x1]
        %v827 = vperm.slane %v825, 0
        %v833 = vunpack.c.l.b16 %v821
        %v834 = vunpack.c.l.b16 %v822
        %v835 = vunpack.c.l.b16 %v823
        %v836 = vunpack.c.l.b16 %v824
        %v837 = vpack.c.b16 %v834, %v833
        %v838 = vpack.c.b16 %v836, %v835
        %841 = vmatpush.bf16.msra.mxu0 0
        %842 = vmatpush.bf16.msra.mxu0 0
        %843 = vmatpush.bf16.msra.mxu0 0
        %844 = vmatpush.bf16.msra.mxu0 0
        %845 = vmatpush.bf16.msra.mxu0 0
        %846 = vmatpush.bf16.msra.mxu0 0
        %847 = vmatpush.bf16.msra.mxu0 %v838
        %848 = vmatpush.bf16.msra.mxu0 %v837
        %849 = vmatmul.bf16.gmra.mxu0 %v806
        %v850 = vpop.f32.mrf.mxu0
        %v851 = vadd.f32 %v827, %v850
        %v852 = vpop.f32.mrf.mxu0
        %853 = vdwg.mxu0
        %855 = vrot.lane.b32.xlu0 %v782, 120
        %v856 = vpop.permute.xlu0 %855
        %858 = vrot.lane.b32.xlu0 %v782, 112
        %v859 = vpop.permute.xlu0 %858
        %861 = vrot.lane.b32.xlu0 %v782, 104
        %v862 = vpop.permute.xlu0 %861
        %v864 = vpack.c.bf16 %v782, %v782
        %v865 = vpack.c.bf16 %v856, %v856
        %v866 = vpack.c.bf16 %v859, %v859
        %v867 = vpack.c.bf16 %v862, %v862
        %869 = vrot.lane.b32.xlu0 %v818, 120
        %v870 = vpop.permute.xlu0 %869
        %872 = vrot.lane.b32.xlu0 %v818, 112
        %v873 = vpop.permute.xlu0 %872
        %875 = vrot.lane.b32.xlu0 %v818, 104
        %v876 = vpop.permute.xlu0 %875
        %v878 = vpack.c.bf16 %v818, %v818
        %v879 = vpack.c.bf16 %v870, %v870
        %v880 = vpack.c.bf16 %v873, %v873
        %v881 = vpack.c.bf16 %v876, %v876
        %883 = vrot.lane.b32.xlu0 %v851, 120
        %v884 = vpop.permute.xlu0 %883
        %886 = vrot.lane.b32.xlu0 %v851, 112
        %v887 = vpop.permute.xlu0 %886
        %889 = vrot.lane.b32.xlu0 %v851, 104
        %v890 = vpop.permute.xlu0 %889
        %v892 = vpack.c.bf16 %v851, %v851
        %v893 = vpack.c.bf16 %v884, %v884
        %v894 = vpack.c.bf16 %v887, %v887
        %v895 = vpack.c.bf16 %v890, %v890
        %vm896 = vcmask 64512
        %v898 = vsel %vm896, %v864, 0
        %v901 = vsel %vm896, %v878, 0
        %903 = vmatpush.bf16.xpose.msra.mxu0 0
        %904 = vmatpush.bf16.xpose.msra.mxu0 0
        %905 = vmatpush.bf16.xpose.msra.mxu0 0
        %906 = vmatpush.bf16.xpose.msra.mxu0 0
        %907 = vmatpush.bf16.xpose.msra.mxu0 0
        %908 = vmatpush.bf16.xpose.msra.mxu0 0
        %909 = vmatpush.bf16.xpose.msra.mxu0 0
        %910 = vmatpush.bf16.xpose.msra.mxu0 %v901
        %911 = vmatmul.bf16.gmra.mxu0 %v898
        %v912 = vpop.f32.mrf.mxu0
        %v913 = vadd.f32 0.0, %v912
        %v914 = vpop.f32.mrf.mxu0
        %915 = vdwg.mxu0
        %v917 = vsel %vm896, %v865, 0
        %v920 = vsel %vm896, %v879, 0
        %922 = vmatpush.bf16.xpose.msra.mxu0 0
        %923 = vmatpush.bf16.xpose.msra.mxu0 0
        %924 = vmatpush.bf16.xpose.msra.mxu0 0
        %925 = vmatpush.bf16.xpose.msra.mxu0 0
        %926 = vmatpush.bf16.xpose.msra.mxu0 0
        %927 = vmatpush.bf16.xpose.msra.mxu0 0
        %928 = vmatpush.bf16.xpose.msra.mxu0 0
        %929 = vmatpush.bf16.xpose.msra.mxu0 %v920
        %930 = vmatmul.bf16.gmra.mxu0 %v917
        %v931 = vpop.f32.mrf.mxu0
        %v932 = vadd.f32 0.0, %v931
        %v933 = vpop.f32.mrf.mxu0
        %934 = vdwg.mxu0
        %v936 = vsel %vm896, %v866, 0
        %v939 = vsel %vm896, %v880, 0
        %941 = vmatpush.bf16.xpose.msra.mxu0 0
        %942 = vmatpush.bf16.xpose.msra.mxu0 0
        %943 = vmatpush.bf16.xpose.msra.mxu0 0
        %944 = vmatpush.bf16.xpose.msra.mxu0 0
        %945 = vmatpush.bf16.xpose.msra.mxu0 0
        %946 = vmatpush.bf16.xpose.msra.mxu0 0
        %947 = vmatpush.bf16.xpose.msra.mxu0 0
        %948 = vmatpush.bf16.xpose.msra.mxu0 %v939
        %949 = vmatmul.bf16.gmra.mxu0 %v936
        %v950 = vpop.f32.mrf.mxu0
        %v951 = vadd.f32 0.0, %v950
        %v952 = vpop.f32.mrf.mxu0
        %953 = vdwg.mxu0
        %v955 = vsel %vm896, %v867, 0
        %v958 = vsel %vm896, %v881, 0
        %960 = vmatpush.bf16.xpose.msra.mxu0 0
        %961 = vmatpush.bf16.xpose.msra.mxu0 0
        %962 = vmatpush.bf16.xpose.msra.mxu0 0
        %963 = vmatpush.bf16.xpose.msra.mxu0 0
        %964 = vmatpush.bf16.xpose.msra.mxu0 0
        %965 = vmatpush.bf16.xpose.msra.mxu0 0
        %966 = vmatpush.bf16.xpose.msra.mxu0 0
        %967 = vmatpush.bf16.xpose.msra.mxu0 %v958
        %968 = vmatmul.bf16.gmra.mxu0 %v955
        %v969 = vpop.f32.mrf.mxu0
        %v970 = vadd.f32 0.0, %v969
        %v971 = vpop.f32.mrf.mxu0
        %972 = vdwg.mxu0
        %v973 = vsel %vm896, %v913, -inf
        %974 = vmax.xlane.f32.xlu0 %v973
        %v975 = vpop.xlane.xlu0 %974
        %v976 = vsel %vm896, %v932, -inf
        %977 = vmax.xlane.f32.xlu0 %v976
        %v978 = vpop.xlane.xlu0 %977
        %v979 = vsel %vm896, %v951, -inf
        %980 = vmax.xlane.f32.xlu0 %v979
        %v981 = vpop.xlane.xlu0 %980
        %v982 = vsel %vm896, %v970, -inf
        %983 = vmax.xlane.f32.xlu0 %v982
        %v984 = vpop.xlane.xlu0 %983
        %v985 = vsub.f32 %v913, %v975
        %v986 = vsub.f32 %v932, %v978
        %v987 = vsub.f32 %v951, %v981
        %v988 = vsub.f32 %v970, %v984
        %v989 = vmul.f32 %v985, 1.442695
        %v990 = vpow.pop %v989
        %v991 = vmul.f32 %v986, 1.442695
        %v992 = vpow.pop %v991
        %v993 = vmul.f32 %v987, 1.442695
        %v994 = vpow.pop %v993
        %v995 = vmul.f32 %v988, 1.442695
        %v996 = vpow.pop %v995
        %v997 = vsel %vm896, %v990, 0.0
        %998 = vadd.xlane.f32.xlu0 %v997
        %v999 = vpop.xlane.xlu0 %998
        %v1000 = vsel %vm896, %v992, 0.0
        %1001 = vadd.xlane.f32.xlu0 %v1000
        %v1002 = vpop.xlane.xlu0 %1001
        %v1003 = vsel %vm896, %v994, 0.0
        %1004 = vadd.xlane.f32.xlu0 %v1003
        %v1005 = vpop.xlane.xlu0 %1004
        %v1006 = vsel %vm896, %v996, 0.0
        %1007 = vadd.xlane.f32.xlu0 %v1006
        %v1008 = vpop.xlane.xlu0 %1007
        %v1009 = vrcp.pop %v999
        %v1010 = vrcp.pop %v1002
        %v1011 = vrcp.pop %v1005
        %v1012 = vrcp.pop %v1008
        %v1013 = vmul.f32 %v990, %v1009
        %v1014 = vmul.f32 %v992, %v1010
        %v1015 = vmul.f32 %v994, %v1011
        %v1016 = vmul.f32 %v996, %v1012
        %v1017 = vpack.c.bf16 %v1013, %v1013
        %v1018 = vpack.c.bf16 %v1014, %v1014
        %v1019 = vpack.c.bf16 %v1015, %v1015
        %v1020 = vpack.c.bf16 %v1016, %v1016
        %v1022 = vsel %vm896, %v1017, 0
        %vm1024 = vcmask 1043456
        %v1026 = vsel %vm1024, %v892, 0
        %1028 = vmatpush.bf16.msra.mxu0 0
        %1029 = vmatpush.bf16.msra.mxu0 0
        %1030 = vmatpush.bf16.msra.mxu0 0
        %1031 = vmatpush.bf16.msra.mxu0 0
        %1032 = vmatpush.bf16.msra.mxu0 0
        %1033 = vmatpush.bf16.msra.mxu0 0
        %1034 = vmatpush.bf16.msra.mxu0 0
        %1035 = vmatpush.bf16.msra.mxu0 %v1026
        %1036 = vmatmul.bf16.gmra.mxu0 %v1022
        %v1037 = vpop.f32.mrf.mxu0
        %v1038 = vadd.f32 0.0, %v1037
        %v1039 = vpop.f32.mrf.mxu0
        %1040 = vdwg.mxu0
        %v1042 = vsel %vm896, %v1018, 0
        %v1045 = vsel %vm1024, %v893, 0
        %1047 = vmatpush.bf16.msra.mxu0 0
        %1048 = vmatpush.bf16.msra.mxu0 0
        %1049 = vmatpush.bf16.msra.mxu0 0
        %1050 = vmatpush.bf16.msra.mxu0 0
        %1051 = vmatpush.bf16.msra.mxu0 0
        %1052 = vmatpush.bf16.msra.mxu0 0
        %1053 = vmatpush.bf16.msra.mxu0 0
        %1054 = vmatpush.bf16.msra.mxu0 %v1045
        %1055 = vmatmul.bf16.gmra.mxu0 %v1042
        %v1056 = vpop.f32.mrf.mxu0
        %v1057 = vadd.f32 0.0, %v1056
        %v1058 = vpop.f32.mrf.mxu0
        %1059 = vdwg.mxu0
        %v1061 = vsel %vm896, %v1019, 0
        %v1064 = vsel %vm1024, %v894, 0
        %1066 = vmatpush.bf16.msra.mxu0 0
        %1067 = vmatpush.bf16.msra.mxu0 0
        %1068 = vmatpush.bf16.msra.mxu0 0
        %1069 = vmatpush.bf16.msra.mxu0 0
        %1070 = vmatpush.bf16.msra.mxu0 0
        %1071 = vmatpush.bf16.msra.mxu0 0
        %1072 = vmatpush.bf16.msra.mxu0 0
        %1073 = vmatpush.bf16.msra.mxu0 %v1064
        %1074 = vmatmul.bf16.gmra.mxu0 %v1061
        %v1075 = vpop.f32.mrf.mxu0
        %v1076 = vadd.f32 0.0, %v1075
        %v1077 = vpop.f32.mrf.mxu0
        %1078 = vdwg.mxu0
        %v1080 = vsel %vm896, %v1020, 0
        %v1083 = vsel %vm1024, %v895, 0
        %1085 = vmatpush.bf16.msra.mxu0 0
        %1086 = vmatpush.bf16.msra.mxu0 0
        %1087 = vmatpush.bf16.msra.mxu0 0
        %1088 = vmatpush.bf16.msra.mxu0 0
        %1089 = vmatpush.bf16.msra.mxu0 0
        %1090 = vmatpush.bf16.msra.mxu0 0
        %1091 = vmatpush.bf16.msra.mxu0 0
        %1092 = vmatpush.bf16.msra.mxu0 %v1083
        %1093 = vmatmul.bf16.gmra.mxu0 %v1080
        %v1094 = vpop.f32.mrf.mxu0
        %v1095 = vadd.f32 0.0, %v1094
        %v1096 = vpop.f32.mrf.mxu0
        %1097 = vdwg.mxu0
        %v1098 = vpack.c.bf16 %v1038, %v1038
        %v1099 = vpack.c.bf16 %v1057, %v1057
        %v1100 = vpack.c.bf16 %v1076, %v1076
        %v1101 = vpack.c.bf16 %v1095, %v1095
        %v1102 = vld [vmem:[#allocation7] sm:$0xf]
        %v1103 = vld [vmem:[#allocation7 + $0x4] sm:$0xf]
        %v1104 = vld [vmem:[#allocation7 + $0x8] sm:$0xf]
        %v1105 = vld [vmem:[#allocation7 + $0xc] sm:$0xf]
        %v1107 = vsel %vm896, %v1098, 0
        %v1110 = vsel %vm1024, %v1102, 0
        %1112 = vmatpush.bf16.msra.mxu0 0
        %1113 = vmatpush.bf16.msra.mxu0 0
        %1114 = vmatpush.bf16.msra.mxu0 0
        %1115 = vmatpush.bf16.msra.mxu0 0
        %1116 = vmatpush.bf16.msra.mxu0 0
        %1117 = vmatpush.bf16.msra.mxu0 0
        %1118 = vmatpush.bf16.msra.mxu0 0
        %1119 = vmatpush.bf16.msra.mxu0 %v1110
        %1120 = vmatmul.bf16.gmra.mxu0 %v1107
        %v1121 = vpop.f32.mrf.mxu0
        %v1122 = vadd.f32 0.0, %v1121
        %v1123 = vpop.f32.mrf.mxu0
        %1124 = vdwg.mxu0
        %v1126 = vsel %vm896, %v1099, 0
        %v1129 = vsel %vm1024, %v1103, 0
        %1131 = vmatpush.bf16.msra.mxu0 0
        %1132 = vmatpush.bf16.msra.mxu0 0
        %1133 = vmatpush.bf16.msra.mxu0 0
        %1134 = vmatpush.bf16.msra.mxu0 0
        %1135 = vmatpush.bf16.msra.mxu0 0
        %1136 = vmatpush.bf16.msra.mxu0 0
        %1137 = vmatpush.bf16.msra.mxu0 0
        %1138 = vmatpush.bf16.msra.mxu0 %v1129
        %1139 = vmatmul.bf16.gmra.mxu0 %v1126
        %v1140 = vpop.f32.mrf.mxu0
        %v1141 = vadd.f32 0.0, %v1140
        %v1142 = vpop.f32.mrf.mxu0
        %1143 = vdwg.mxu0
        %v1145 = vsel %vm896, %v1100, 0
        %v1148 = vsel %vm1024, %v1104, 0
        %1150 = vmatpush.bf16.msra.mxu0 0
        %1151 = vmatpush.bf16.msra.mxu0 0
        %1152 = vmatpush.bf16.msra.mxu0 0
        %1153 = vmatpush.bf16.msra.mxu0 0
        %1154 = vmatpush.bf16.msra.mxu0 0
        %1155 = vmatpush.bf16.msra.mxu0 0
        %1156 = vmatpush.bf16.msra.mxu0 0
        %1157 = vmatpush.bf16.msra.mxu0 %v1148
        %1158 = vmatmul.bf16.gmra.mxu0 %v1145
        %v1159 = vpop.f32.mrf.mxu0
        %v1160 = vadd.f32 0.0, %v1159
        %v1161 = vpop.f32.mrf.mxu0
        %1162 = vdwg.mxu0
        %v1164 = vsel %vm896, %v1101, 0
        %v1167 = vsel %vm1024, %v1105, 0
        %1169 = vmatpush.bf16.msra.mxu0 0
        %1170 = vmatpush.bf16.msra.mxu0 0
        %1171 = vmatpush.bf16.msra.mxu0 0
        %1172 = vmatpush.bf16.msra.mxu0 0
        %1173 = vmatpush.bf16.msra.mxu0 0
        %1174 = vmatpush.bf16.msra.mxu0 0
        %1175 = vmatpush.bf16.msra.mxu0 0
        %1176 = vmatpush.bf16.msra.mxu0 %v1167
        %1177 = vmatmul.bf16.gmra.mxu0 %v1164
        %v1178 = vpop.f32.mrf.mxu0
        %v1179 = vadd.f32 0.0, %v1178
        %v1180 = vpop.f32.mrf.mxu0
        %1181 = vdwg.mxu0
        %v1182 = vsel %vm685, %v1122, 0.0
        %v1183 = vsel %vm685, %v1141, 0.0
        %v1184 = vadd.f32 %v1182, %v1183
        %v1185 = vsel %vm685, %v1160, 0.0
        %v1186 = vadd.f32 %v1184, %v1185
        %v1187 = vsel %vm685, %v1179, 0.0
        %v1188 = vadd.f32 %v1186, %v1187
        %v1189 = vld [vmem:[%s11] sm:$0x1]
        %v1191 = vperm.slane %v1189, 0
        %v1193 = vadd.f32 %v1188, %v1191
        %v1194 = vadd.f32 %v1193, %v681
        %v1195 = vld [vmem:[%s12] sm:$0x1]
        %v1196 = vld [vmem:[%s13] sm:$0x1]
        %v1197 = vsel %vm685, %v1194, 0.0
        %1198 = vadd.xlane.f32.xlu0 %v1197
        %v1199 = vpop.xlane.xlu0 %1198
        %v1200 = vmul.f32 %v1199, %v695
        %v1201 = vsub.f32 %v1194, %v1200
        %v1202 = vmul.f32 %v1201, %v1201
        %v1203 = vsel %vm685, %v1202, 0.0
        %1204 = vadd.xlane.f32.xlu0 %v1203
        %v1205 = vpop.xlane.xlu0 %1204
        %v1206 = vmul.f32 %v1205, %v695
        %v1207 = vadd.f32 %v1206, 1e-06
        %v1208 = vrsqrt.pop %v1207
        %v1209 = vmul.f32 %v1208, %v1207
        %v1210 = vmul.f32 %v1209, %v1208
        %v1211 = vmul.f32 0.5, %v1210
        %v1212 = vsub.f32 1.5, %v1211
        %v1213 = vmul.f32 %v1208, %v1212
        %vm1214 = vweird.f32 %v1207
        %vm1215 = vweird.f32 %v1208
        %vm1216 = vmor %vm1214, %vm1215
        %v1217 = vsel %vm1216, %v1208, %v1213
        %v1218 = vmul.f32 %v1201, %v1217
        %v1220 = vperm.slane %v1195, 0
        %v1222 = vmul.f32 %v1218, %v1220
        %v1224 = vperm.slane %v1196, 0
        %v1226 = vadd.f32 %v1222, %v1224
        %v1227 = vpack.c.bf16 %v1226, %v1226
        %v1228 = vld [vmem:[#allocation8] sm:$0xf]
        %v1229 = vld [vmem:[#allocation8 + $0x4] sm:$0xf]
        %v1230 = vld [vmem:[#allocation8 + $0x8] sm:$0xf]
        %v1231 = vld [vmem:[#allocation8 + $0xc] sm:$0xf]
        %v1232 = vld [vmem:[%s15] sm:$0x1]
        %v1234 = vperm.slane %v1232, 0
        %v1240 = vunpack.c.l.b16 %v1228
        %v1241 = vunpack.c.l.b16 %v1229
        %v1242 = vunpack.c.l.b16 %v1230
        %v1243 = vunpack.c.l.b16 %v1231
        %v1244 = vpack.c.b16 %v1241, %v1240
        %v1245 = vpack.c.b16 %v1243, %v1242
        %v1249 = vsel %vm685, %v1227, 0
        %1251 = vmatpush.bf16.msra.mxu0 0
        %1252 = vmatpush.bf16.msra.mxu0 0
        %1253 = vmatpush.bf16.msra.mxu0 0
        %1254 = vmatpush.bf16.msra.mxu0 0
        %1255 = vmatpush.bf16.msra.mxu0 0
        %1256 = vmatpush.bf16.msra.mxu0 0
        %1257 = vmatpush.bf16.msra.mxu0 %v1245
        %1258 = vmatpush.bf16.msra.mxu0 %v1244
        %1259 = vmatmul.bf16.gmra.mxu0 %v1249
        %v1260 = vpop.f32.mrf.mxu0
        %v1261 = vadd.f32 %v1234, %v1260
        %v1262 = vpop.f32.mrf.mxu0
        %1263 = vdwg.mxu0
        %v1264 = vmul.f32 %v1261, 0.5
        %v1265 = vmul.f32 %v1261, 0.70710677
        %v1266 = vmul.f32 %v1265, %v1265
        %v1267 = vmin.f32 16.0, %v1266
        %v1268 = vmul.f32 %v1267, 2.1237322e-06
        %v1269 = vadd.f32 %v1268, 0.00028619796
        %v1270 = vmul.f32 %v1267, %v1269
        %v1271 = vadd.f32 %v1270, 0.0036580483
        %v1272 = vmul.f32 %v1267, %v1271
        %v1273 = vadd.f32 %v1272, 0.05243302
        %v1274 = vmul.f32 %v1267, %v1273
        %v1275 = vadd.f32 %v1274, 0.18741608
        %v1276 = vmul.f32 %v1267, %v1275
        %v1277 = vadd.f32 %v1276, 1.1283791
        %v1278 = vmul.f32 %v1265, %v1277
        %v1279 = vmul.f32 %v1267, 3.8918573e-05
        %v1280 = vadd.f32 %v1279, 0.001143296
        %v1281 = vmul.f32 %v1267, %v1280
        %v1282 = vadd.f32 %v1281, 0.014752088
        %v1283 = vmul.f32 %v1267, %v1282
        %v1284 = vadd.f32 %v1283, 0.112945676
        %v1285 = vmul.f32 %v1267, %v1284
        %v1286 = vadd.f32 %v1285, 0.4994258
        %v1287 = vmul.f32 %v1267, %v1286
        %v1288 = vadd.f32 %v1287, 1.0
        %v1289 = vrcp.pop %v1288
        %v1290 = vmul.f32 %v1288, %v1289
        %v1291 = vsub.f32 1.0, %v1290
        %v1292 = vmul.f32 %v1289, %v1291
        %v1293 = vadd.f32 %v1289, %v1292
        %vm1294 = vweird.f32 %v1288
        %vm1295 = vweird.f32 %v1289
        %vm1296 = vmor %vm1294, %vm1295
        %v1297 = vsel %vm1296, %v1289, %v1293
        %v1298 = vand.u32 2147483647, %v1288
        %vm1299 = vcmp.eq.f32.partialorder %v1298, 8.507059e+37
        %v1300 = vand.u32 %v1288, 2147483648
        %v1301 = vor.u32 1.1754944e-38, %v1300
        %v1302 = vsel %vm1299, %v1301, %v1297
        %v1303 = vmul.f32 %v1278, %v1302
        %v1304 = vmin.f32 %v1303, 1.0
        %v1305 = vmax.f32 %v1304, -1.0
        %v1306 = vadd.f32 %v1305, 1.0
        %v1307 = vmul.f32 %v1264, %v1306
        %v1308 = vpack.c.bf16 %v1307, %v1307
        %v1309 = vld [vmem:[%s16] sm:$0xf]
        %v1310 = vld [vmem:[%s16 + $0x4] sm:$0xf]
        %v1311 = vld [vmem:[%s16 + $0x8] sm:$0xf]
        %v1312 = vld [vmem:[%s16 + $0xc] sm:$0xf]
        %v1313 = vld [vmem:[%s16 + $0x10] sm:$0xf]
        %v1314 = vld [vmem:[%s16 + $0x14] sm:$0xf]
        %v1315 = vld [vmem:[%s16 + $0x18] sm:$0xf]
        %v1316 = vld [vmem:[%s16 + $0x1c] sm:$0xf]
        %v1317 = vld [vmem:[%s17] sm:$0x1]
        %v1319 = vperm.slane %v1317, 0
        %v1329 = vunpack.c.l.b16 %v1309
        %v1330 = vunpack.c.l.b16 %v1310
        %v1331 = vunpack.c.l.b16 %v1311
        %v1332 = vunpack.c.l.b16 %v1312
        %v1333 = vunpack.c.l.b16 %v1313
        %v1334 = vunpack.c.l.b16 %v1314
        %v1335 = vunpack.c.l.b16 %v1315
        %v1336 = vunpack.c.l.b16 %v1316
        %v1337 = vpack.c.b16 %v1330, %v1329
        %v1338 = vpack.c.b16 %v1332, %v1331
        %v1339 = vpack.c.b16 %v1334, %v1333
        %v1340 = vpack.c.b16 %v1336, %v1335
        %vm1345 = vcmask 523264
        %v1347 = vsel %vm1345, %v1308, 0
        %1349 = vmatpush.bf16.msra.mxu0 0
        %1350 = vmatpush.bf16.msra.mxu0 0
        %1351 = vmatpush.bf16.msra.mxu0 0
        %1352 = vmatpush.bf16.msra.mxu0 0
        %1353 = vmatpush.bf16.msra.mxu0 %v1340
        %1354 = vmatpush.bf16.msra.mxu0 %v1339
        %1355 = vmatpush.bf16.msra.mxu0 %v1338
        %1356 = vmatpush.bf16.msra.mxu0 %v1337
        %1357 = vmatmul.bf16.gmra.mxu0 %v1347
        %v1358 = vpop.f32.mrf.mxu0
        %v1359 = vadd.f32 %v1319, %v1358
        %v1360 = vpop.f32.mrf.mxu0
        %1361 = vdwg.mxu0
        %v1362 = vadd.f32 %v1194, %v1359
        %1363 = vst.msk [vmem:[%s668] sm:$0xff] %vm685, %v1362
        %s1364 = sand.u32 %s447, 1
        %s1365 = scalar_lea.sflag [#allocation4], %s1364
        %s1366 = sand.u32 %s447, 1
        %s1367 = smul.addr %s1366, 8
        %s1368 = scalar_lea.vmem [#allocation10], %s1367
        // Predicated region
        $region109: #{tpu_custom_call.1} parent=91 // pred_check
          %p1369 = pneg %p457
        $region110: #{tpu_custom_call.1} parent=91 // pred_check_branch
          %1371 = sbr.rel (%p1369) target = $region112
        $region111: #{tpu_custom_call.1} parent=91 // pred_region
          %1373 = vsyncadd %s1365, 0
          %s1374 = sadd.s32 %s40, %s39
          %s1375 = smul.addr %s1374, 8
          %s1376 = scalar_lea.hbm %s18, %s1375
          %s1378 = sshll.u32 %s1368, 4
          %s1379 = int_to_ptr.vmem [resolvable:$true] %s1378
          %s1380 = sshll.u32 %s1376, 4
          %s1381 = int_to_ptr.hbm [resolvable:$true] %s1380
          %1383 = dma.vmem_to_hbm [thread:$0]  %s1379, 128, %s1381, %s1365
        $region112: #{tpu_custom_call.1} parent=91 // pred_fallthru
          _
      $region92: #{tpu_custom_call.1} parent=5 // pred_fallthru
        _
      %p1384 = scmp.le.s32.totalorder 2, %s30
      // Predicated region
      $region113: #{tpu_custom_call.1} parent=5 // pred_check
        %p1385 = pneg %p1384
      $region114: #{tpu_custom_call.1} parent=5 // pred_check_branch
        %1387 = sbr.rel (%p1385) target = $region116
      $region115: #{tpu_custom_call.1} parent=5 // pred_region
        %s1388 = ssub.s32 %s30, 2
        // Predicated region
        $region117: #{tpu_custom_call.1} parent=115 // pred_check
          %p1389 = pneg %p463
        $region118: #{tpu_custom_call.1} parent=115 // pred_check_branch
          %1391 = sbr.rel (%p1389) target = $region120
        $region119: #{tpu_custom_call.1} parent=115 // pred_region
          %s1392 = sand.u32 %s448, 1
          %s1393 = scalar_lea.sflag [#allocation4], %s1392
          %s1394 = sand.u32 %s448, 1
          %s1395 = smul.addr %s1394, 8
          %s1396 = scalar_lea.vmem [#allocation10], %s1395
          %1398 = dma.done %s1393, 128
        $region120: #{tpu_custom_call.1} parent=115 // pred_fallthru
          _
      $region116: #{tpu_custom_call.1} parent=5 // pred_fallthru
        _
    $region6: #{tpu_custom_call.1} parent=1 // loop_footer
      %s34 = sadd.s32 1, %s30
    $region7: #{tpu_custom_call.1} parent=1 // loop_footer_branch
      %29 = sbr.rel target = $region3
    $region8: #{tpu_custom_call.1} parent=1 // loop_exit
      _
    %1399 = vsyncpa [#allocation3], 1
    %s1400 = scalar_lea.sflag [#allocation3], 1
    %1401 = vsyncpa %s1400, 1
    %1402 = vsyncpa [#allocation6], 1
    %1403 = vsyncpa [#allocation9], 1
    %1404 = vsyncpa [#allocation4], 1
    %s1405 = scalar_lea.sflag [#allocation4], 1
    %1406 = vsyncpa %s1405, 1

</llo_original>
